<compile_context>
chip_gen: v7x
topology: tpu7x:2x2x1
jax: 0.10.0
libtpu: 0.0.40
codegen_flags: <defaults>
</compile_context>

<pallas_src>
import functools

import jax
import jax.numpy as jnp
from jax.experimental import pallas as pl
from jax.experimental.pallas import tpu as pltpu


def _round_up(x, m):
    return (x + m - 1) // m * m


# ----------------------------------------------------------------------------
# Fused multi-layer GIN kernel
# ----------------------------------------------------------------------------
def _fused_gin_kernel(h0_ref, a_ref, c_ref, ecat_ref,
                      w1_ref, b1_ref, w2_ref, b2_ref, gamma_ref, beta_ref,
                      out_ref,
                      h_res, pre_bn, stats,
                      *, num_nodes, tile_n):
    """grid = (num_layers, num_node_tiles).

    h0    : [Np, Dp]        initial node embeddings (resident, read at l==0)
    a     : [tile_n, Np]    bf16 adjacency (with self loops) row tile
    c     : [tile_n, 16]    per-destination edge-type counts row tile
    ecat  : [1, 16, Dp]     this layer's stacked edge-embedding table
    w1/b1 : [1, Dp, Hp] / [1, 1, Hp]
    w2/b2 : [1, Hp, Dp] / [1, 1, Dp]
    gamma/beta : [1, 1, Dp]
    out   : [Np, Dp]        node representations of the last layer
    h_res : VMEM [Np, Dp]   resident current node features
    pre_bn: VMEM [Np, Dp]   pre-BatchNorm MLP output of the current layer
    stats : VMEM [2, Dp]    running sum / sum-of-squares for BatchNorm
    """
    l = pl.program_id(0)
    i = pl.program_id(1)
    n_tiles = pl.num_programs(1)
    num_layers = pl.num_programs(0)

    # initialize the resident node features once
    @pl.when(jnp.logical_and(l == 0, i == 0))
    def _():
        h_res[...] = h0_ref[...]

    # zero the BatchNorm stat accumulators at the start of every layer
    @pl.when(i == 0)
    def _():
        stats[...] = jnp.zeros_like(stats)

    # ---- message passing for this row tile: agg = A_tile @ h + C_tile @ Ecat_l
    h_b = h_res[...].astype(jnp.bfloat16)
    agg = jnp.dot(a_ref[...], h_b, preferred_element_type=jnp.float32)
    agg = agg + jnp.dot(c_ref[...], ecat_ref[0], preferred_element_type=jnp.float32)

    # ---- GIN MLP: Linear(D,2D) -> ReLU -> Linear(2D,D)   (bf16 MXU, f32 acc)
    hid = jnp.dot(agg.astype(jnp.bfloat16), w1_ref[0],
                  preferred_element_type=jnp.float32) + b1_ref[0]
    hid = jnp.maximum(hid, 0.0)
    pre = jnp.dot(hid.astype(jnp.bfloat16), w2_ref[0],
                  preferred_element_type=jnp.float32) + b2_ref[0]

    # stash pre-BN rows; accumulate BN statistics with padded rows masked out
    start = pl.multiple_of(i * tile_n, tile_n)
    pre_bn[pl.ds(start, tile_n), :] = pre
    row = jax.lax.broadcasted_iota(jnp.int32, pre.shape, 0) + i * tile_n
    pre_m = jnp.where(row < num_nodes, pre, 0.0)
    stats[0:1, :] += jnp.sum(pre_m, axis=0, keepdims=True)
    stats[1:2, :] += jnp.sum(pre_m * pre_m, axis=0, keepdims=True)

    # ---- finalize layer: BatchNorm1d (biased batch var, eps=1e-5) + ReLU ----
    @pl.when(i == n_tiles - 1)
    def _():
        inv_n = 1.0 / float(num_nodes)
        mean = stats[0:1, :] * inv_n
        var = stats[1:2, :] * inv_n - mean * mean
        x = (pre_bn[...] - mean) * jax.lax.rsqrt(var + 1e-5)
        x = x * gamma_ref[0] + beta_ref[0]
        # ReLU on all but the last layer (drop_ratio=0 -> dropout is identity)
        x = jnp.where(l == num_layers - 1, x, jnp.maximum(x, 0.0))
        h_res[...] = x
        out_ref[...] = x   # only the last layer's content survives (JK='last')


def fused_gin_layers(h0, A, C, Ecat, W1, B1, W2, B2, Gamma, Beta, *,
                     num_nodes, tile_n):
    num_layers = W1.shape[0]
    n_pad, d_pad = h0.shape
    h_pad = W1.shape[2]
    c_dim = C.shape[1]
    n_tiles = n_pad // tile_n

    kern = functools.partial(_fused_gin_kernel, num_nodes=num_nodes, tile_n=tile_n)

    flops = 2 * num_layers * n_pad * (n_pad * d_pad + c_dim * d_pad
                                      + d_pad * h_pad + h_pad * d_pad)
    bytes_accessed = (h0.size * 4 + num_layers * (A.size * 2 + C.size * 4)
                      + Ecat.size * 4 + W1.size * 2 + W2.size * 2
                      + (B1.size + B2.size + Gamma.size + Beta.size) * 4
                      + n_pad * d_pad * 4)

    grid_spec = pltpu.PrefetchScalarGridSpec(
        num_scalar_prefetch=0,
        grid=(num_layers, n_tiles),
        in_specs=[
            pl.BlockSpec((n_pad, d_pad), lambda l, i: (0, 0)),        # h0 (resident)
            pl.BlockSpec((tile_n, n_pad), lambda l, i: (i, 0)),       # A row tile
            pl.BlockSpec((tile_n, c_dim), lambda l, i: (i, 0)),       # C row tile
            pl.BlockSpec((1, c_dim, d_pad), lambda l, i: (l, 0, 0)),  # Ecat[l]
            pl.BlockSpec((1, d_pad, h_pad), lambda l, i: (l, 0, 0)),  # W1[l]
            pl.BlockSpec((1, 1, h_pad), lambda l, i: (l, 0, 0)),      # B1[l]
            pl.BlockSpec((1, h_pad, d_pad), lambda l, i: (l, 0, 0)),  # W2[l]
            pl.BlockSpec((1, 1, d_pad), lambda l, i: (l, 0, 0)),      # B2[l]
            pl.BlockSpec((1, 1, d_pad), lambda l, i: (l, 0, 0)),      # gamma[l]
            pl.BlockSpec((1, 1, d_pad), lambda l, i: (l, 0, 0)),      # beta[l]
        ],
        out_specs=pl.BlockSpec((n_pad, d_pad), lambda l, i: (0, 0)),
        scratch_shapes=[
            pltpu.VMEM((n_pad, d_pad), jnp.float32),   # h_res
            pltpu.VMEM((n_pad, d_pad), jnp.float32),   # pre_bn
            pltpu.VMEM((2, d_pad), jnp.float32),       # sum / sum-of-squares
        ],
    )
    return pl.pallas_call(
        kern,
        out_shape=jax.ShapeDtypeStruct((n_pad, d_pad), jnp.float32),
        grid_spec=grid_spec,
        compiler_params=pltpu.CompilerParams(
            dimension_semantics=("arbitrary", "arbitrary"),
            vmem_limit_bytes=32 * 1024 * 1024),
        cost_estimate=pl.CostEstimate(flops=int(flops),
                                      transcendentals=int(num_layers * d_pad),
                                      bytes_accessed=int(bytes_accessed)),
    )(h0, A, C, Ecat, W1, B1, W2, B2, Gamma, Beta)


# ----------------------------------------------------------------------------
# Mean pooling + prediction head
# ----------------------------------------------------------------------------
def _pool_pred_kernel(pmat_ref, h_ref, w_ref, b_ref, graph_ref, pred_ref):
    g = jnp.dot(pmat_ref[...], h_ref[...], preferred_element_type=jnp.float32)
    graph_ref[...] = g
    pred_ref[...] = jnp.dot(g, w_ref[...], preferred_element_type=jnp.float32) + b_ref[...]


def pool_and_predict(pmat, node_rep, w, b):
    G = pmat.shape[0]
    D = node_rep.shape[1]
    T = w.shape[1]
    vspec = pl.BlockSpec(memory_space=pltpu.MemorySpace.VMEM)
    return pl.pallas_call(
        _pool_pred_kernel,
        out_shape=(jax.ShapeDtypeStruct((G, D), jnp.float32),
                   jax.ShapeDtypeStruct((G, T), jnp.float32)),
        in_specs=[vspec] * 4,
        out_specs=(vspec, vspec),
        compiler_params=pltpu.CompilerParams(vmem_limit_bytes=32 * 1024 * 1024),
    )(pmat, node_rep, w, b)


# ----------------------------------------------------------------------------
# Parameter construction (deterministic, in-script)
# ----------------------------------------------------------------------------
def xavier_uniform(key, shape):
    fan_in, fan_out = shape[0], shape[1]
    bound = (6.0 / (fan_in + fan_out)) ** 0.5
    return jax.random.uniform(key, shape, jnp.float32, -bound, bound)


def init_params(key, num_layer, emb_dim, num_tasks,
                num_atom_type=120, num_chirality_tag=3,
                num_bond_type=6, num_bond_direction=3):
    keys = iter(jax.random.split(key, 8 + 8 * num_layer))
    p = {
        "x_emb1": xavier_uniform(next(keys), (num_atom_type, emb_dim)),
        "x_emb2": xavier_uniform(next(keys), (num_chirality_tag, emb_dim)),
        "layers": [],
        "pred_w": xavier_uniform(next(keys), (emb_dim, num_tasks)),
        "pred_b": jnp.zeros((1, num_tasks), jnp.float32),
    }
    for _ in range(num_layer):
        layer = {
            "e_emb1": xavier_uniform(next(keys), (num_bond_type, emb_dim)),
            "e_emb2": xavier_uniform(next(keys), (num_bond_direction, emb_dim)),
            "w1": xavier_uniform(next(keys), (emb_dim, 2 * emb_dim)),
            "b1": jnp.zeros((1, 2 * emb_dim), jnp.float32),
            "w2": xavier_uniform(next(keys), (2 * emb_dim, emb_dim)),
            "b2": jnp.zeros((1, emb_dim), jnp.float32),
            "gamma": jnp.ones((1, emb_dim), jnp.float32),
            "beta": jnp.zeros((1, emb_dim), jnp.float32),
        }
        p["layers"].append(layer)
    return p


# ----------------------------------------------------------------------------
# Forward (structure/embedding glue in plain JAX, hot path in Pallas)
# ----------------------------------------------------------------------------
def gnn_graphpred_forward(params, x, edge_index, edge_attr, batch, num_graphs,
                          *, tile_n=16):
    N = x.shape[0]
    emb_dim = params["x_emb1"].shape[1]
    num_tasks = params["pred_w"].shape[1]

    d_pad = _round_up(emb_dim, 128)          # lane-dense feature dim
    h_pad = _round_up(2 * emb_dim, 128)      # lane-dense MLP hidden dim
    t_pad = _round_up(num_tasks, 128)        # lane-dense prediction dim
    n_pad = _round_up(N, tile_n)

    # node embeddings (embedding lookup = glue gather), zero-padded
    h0 = (jnp.take(params["x_emb1"], x[:, 0], axis=0)
          + jnp.take(params["x_emb2"], x[:, 1], axis=0)).astype(jnp.float32)
    h0 = jnp.zeros((n_pad, d_pad), jnp.float32).at[:N, :emb_dim].set(h0)

    # add self loops (src=dst=i, edge_attr=[4, 0]) as in GINConv
    loop_idx = jnp.arange(N, dtype=edge_index.dtype)
    src = jnp.concatenate([edge_index[0], loop_idx])
    dst = jnp.concatenate([edge_index[1], loop_idx])
    loop_attr = jnp.tile(jnp.array([[4, 0]], dtype=edge_attr.dtype), (N, 1))
    ea = jnp.concatenate([edge_attr, loop_attr], axis=0)

    # adjacency-with-self-loops counts (exact small integers -> bf16 is exact)
    A = jnp.zeros((n_pad, n_pad), jnp.float32).at[dst, src].add(1.0)
    A = A.astype(jnp.bfloat16)
    # per-destination edge-type counts: bond type (6 -> pad 8) | direction (3 -> pad 8)
    C1 = jnp.zeros((n_pad, 8), jnp.float32).at[dst, ea[:, 0]].add(1.0)
    C2 = jnp.zeros((n_pad, 8), jnp.float32).at[dst, ea[:, 1]].add(1.0)
    C = jnp.concatenate([C1, C2], axis=1)                       # [n_pad, 16]

    # stack + pad per-layer parameters (layer axis streamed by the kernel grid)
    def pad2(a, r, c):
        return jnp.zeros((r, c), jnp.float32).at[:a.shape[0], :a.shape[1]].set(a)

    Ecat, W1, B1, W2, B2, Gamma, Beta = [], [], [], [], [], [], []
    for lp in params["layers"]:
        Ecat.append(jnp.concatenate([pad2(lp["e_emb1"], 8, d_pad),
                                     pad2(lp["e_emb2"], 8, d_pad)], axis=0))
        W1.append(pad2(lp["w1"], d_pad, h_pad))
        B1.append(pad2(lp["b1"], 1, h_pad))
        W2.append(pad2(lp["w2"], h_pad, d_pad))
        B2.append(pad2(lp["b2"], 1, d_pad))
        Gamma.append(pad2(lp["gamma"], 1, d_pad))
        Beta.append(pad2(lp["beta"], 1, d_pad))
    Ecat = jnp.stack(Ecat)                              # [L, 16, d_pad] f32
    W1 = jnp.stack(W1).astype(jnp.bfloat16)             # [L, d_pad, h_pad]
    B1 = jnp.stack(B1)                                  # [L, 1, h_pad]
    W2 = jnp.stack(W2).astype(jnp.bfloat16)             # [L, h_pad, d_pad]
    B2 = jnp.stack(B2)                                  # [L, 1, d_pad]
    Gamma = jnp.stack(Gamma)
    Beta = jnp.stack(Beta)

    # TODO(synk): dropout (drop_ratio=0 here -> identity) not implemented.
    node_pad = fused_gin_layers(h0, A, C, Ecat, W1, B1, W2, B2, Gamma, Beta,
                                num_nodes=N, tile_n=tile_n)
    node_rep = node_pad[:N, :emb_dim]                   # JK = 'last'

    # mean-pooling matrix [G, n_pad] (padded node columns stay zero)
    onehot_b = jax.nn.one_hot(batch, num_graphs, dtype=jnp.float32).T   # [G, N]
    counts = jnp.maximum(jnp.sum(onehot_b, axis=1, keepdims=True), 1.0)
    pmat = jnp.zeros((num_graphs, n_pad), jnp.float32).at[:, :N].set(onehot_b / counts)

    pw = jnp.zeros((d_pad, t_pad), jnp.float32).at[:emb_dim, :num_tasks].set(params["pred_w"])
    pb = jnp.zeros((1, t_pad), jnp.float32).at[:, :num_tasks].set(params["pred_b"])

    graph_pad, pred_pad = pool_and_predict(pmat, node_pad, pw, pb)
    return pred_pad[:, :num_tasks], graph_pad[:, :emb_dim], node_rep


# ----------------------------------------------------------------------------
# Demo
# ----------------------------------------------------------------------------
if __name__ == "__main__":
    num_layer = 3
    emb_dim = 32
    num_tasks = 3
    nodes_per_graph = 16
    num_graphs = 2
    N = nodes_per_graph * num_graphs        # 32 nodes total
    E = 48                                  # directed edges

    key = jax.random.PRNGKey(0)
    k_params, k_x1, k_x2, k_src, k_dst, k_ea1, k_ea2 = jax.random.split(key, 7)

    params = init_params(k_params, num_layer, emb_dim, num_tasks)

    # node features: [:,0] atom type in [0,120), [:,1] chirality in [0,3)
    x = jnp.stack([jax.random.randint(k_x1, (N,), 0, 120),
                   jax.random.randint(k_x2, (N,), 0, 3)], axis=1).astype(jnp.int32)

    # edges within each graph of 16 nodes
    src0 = jax.random.randint(k_src, (E // 2,), 0, nodes_per_graph)
    dst0 = jax.random.randint(k_dst, (E // 2,), 0, nodes_per_graph)
    src = jnp.concatenate([src0, src0 + nodes_per_graph]).astype(jnp.int32)
    dst = jnp.concatenate([dst0, dst0 + nodes_per_graph]).astype(jnp.int32)
    edge_index = jnp.stack([src, dst], axis=0)

    # edge attrs: bond type in [0,4) (4 reserved for self-loop), direction in [0,3)
    edge_attr = jnp.stack([jax.random.randint(k_ea1, (E,), 0, 4),
                           jax.random.randint(k_ea2, (E,), 0, 3)], axis=1).astype(jnp.int32)

    batch = jnp.concatenate([jnp.full((nodes_per_graph,), g, jnp.int32)
                             for g in range(num_graphs)])

    pred, graph_rep, node_rep = gnn_graphpred_forward(
        params, x, edge_index, edge_attr, batch, num_graphs, tile_n=16)
    jax.block_until_ready((pred, graph_rep, node_rep))

    assert pred.shape == (num_graphs, num_tasks)
    assert graph_rep.shape == (num_graphs, emb_dim)
    assert node_rep.shape == (N, emb_dim)
    assert bool(jnp.all(jnp.isfinite(pred)))
    print("KERNEL_OK")
</pallas_src>

<mosaic_0001>
module attributes {stable_mosaic.version = 11 : i64} {
  func.func @_fused_gin_kernel(%arg0: i32, %arg1: i32, %arg2: memref<32x128xf32, #tpu.memory_space<vmem>>, %arg3: memref<16x32xbf16, #tpu.memory_space<vmem>>, %arg4: memref<16x16xf32, #tpu.memory_space<vmem>>, %arg5: memref<1x16x128xf32, #tpu.memory_space<vmem>>, %arg6: memref<1x128x128xbf16, #tpu.memory_space<vmem>>, %arg7: memref<1x1x128xf32, #tpu.memory_space<vmem>>, %arg8: memref<1x128x128xbf16, #tpu.memory_space<vmem>>, %arg9: memref<1x1x128xf32, #tpu.memory_space<vmem>>, %arg10: memref<1x1x128xf32, #tpu.memory_space<vmem>>, %arg11: memref<1x1x128xf32, #tpu.memory_space<vmem>>, %arg12: memref<32x128xf32, #tpu.memory_space<vmem>>, %arg13: memref<32x128xf32, #tpu.memory_space<vmem>>, %arg14: memref<32x128xf32, #tpu.memory_space<vmem>>, %arg15: memref<2x128xf32, #tpu.memory_space<vmem>>) attributes {dimension_semantics = [#tpu.dimension_semantics<arbitrary>, #tpu.dimension_semantics<arbitrary>], iteration_bounds = array<i64: 3, 2>, scalar_prefetch = 0 : i64, scratch_operands = 3 : i64, tpu.core_type = #tpu.core_type<tc>, window_params = [{pipeline_mode = #tpu.pipeline_mode<synchronous>, transform_indices = @transform_0, window_bounds = array<i64: 32, 128>}, {transform_indices = @transform_1, window_bounds = array<i64: 16, 32>}, {transform_indices = @transform_2, window_bounds = array<i64: 16, 16>}, {transform_indices = @transform_3, window_bounds = array<i64: 1, 16, 128>}, {transform_indices = @transform_4, window_bounds = array<i64: 1, 128, 128>}, {transform_indices = @transform_5, window_bounds = array<i64: 1, 1, 128>}, {transform_indices = @transform_6, window_bounds = array<i64: 1, 128, 128>}, {transform_indices = @transform_7, window_bounds = array<i64: 1, 1, 128>}, {transform_indices = @transform_8, window_bounds = array<i64: 1, 1, 128>}, {transform_indices = @transform_9, window_bounds = array<i64: 1, 1, 128>}, {pipeline_mode = #tpu.pipeline_mode<synchronous>, transform_indices = @transform_10, window_bounds = array<i64: 32, 128>}]} {
    %c0_i32 = arith.constant 0 : i32
    %0 = arith.cmpi eq, %arg0, %c0_i32 : i32
    %c0_i32_0 = arith.constant 0 : i32
    %1 = arith.cmpi eq, %arg1, %c0_i32_0 : i32
    %2 = arith.andi %0, %1 : i1
    %3 = arith.extui %2 : i1 to i32
    %c0_i32_1 = arith.constant 0 : i32
    %4 = arith.cmpi ne, %3, %c0_i32_1 : i32
    scf.if %4 {
      %c0_41 = arith.constant 0 : index
      %c0_42 = arith.constant 0 : index
      %61 = vector.load %arg2[%c0_41, %c0_42] : memref<32x128xf32, #tpu.memory_space<vmem>>, vector<32x128xf32>
      %c0_43 = arith.constant 0 : index
      %c0_44 = arith.constant 0 : index
      %62 = vector.load %arg13[%c0_43, %c0_44] : memref<32x128xf32, #tpu.memory_space<vmem>>, vector<32x128xf32>
      tpu.vector_store %arg13[%c0_43, %c0_44], %61 {strides = array<i32>} : memref<32x128xf32, #tpu.memory_space<vmem>>, vector<32x128xf32>,
    } else {
    }
    %c0_i32_2 = arith.constant 0 : i32
    %5 = arith.cmpi eq, %arg1, %c0_i32_2 : i32
    %6 = arith.extui %5 : i1 to i32
    %c0_i32_3 = arith.constant 0 : i32
    %7 = arith.cmpi ne, %6, %c0_i32_3 : i32
    scf.if %7 {
      %cst_41 = arith.constant 0.000000e+00 : f32
      %61 = vector.broadcast %cst_41 : f32 to vector<2x128xf32>
      %c0_42 = arith.constant 0 : index
      %c0_43 = arith.constant 0 : index
      %62 = vector.load %arg15[%c0_42, %c0_43] : memref<2x128xf32, #tpu.memory_space<vmem>>, vector<2x128xf32>
      tpu.vector_store %arg15[%c0_42, %c0_43], %61 {strides = array<i32>} : memref<2x128xf32, #tpu.memory_space<vmem>>, vector<2x128xf32>,
    } else {
    }
    %c0 = arith.constant 0 : index
    %c0_4 = arith.constant 0 : index
    %8 = vector.load %arg13[%c0, %c0_4] : memref<32x128xf32, #tpu.memory_space<vmem>>, vector<32x128xf32>
    %9 = arith.truncf %8 : vector<32x128xf32> to vector<32x128xbf16>
    %c0_5 = arith.constant 0 : index
    %c0_6 = arith.constant 0 : index
    %10 = vector.load %arg3[%c0_5, %c0_6] : memref<16x32xbf16, #tpu.memory_space<vmem>>, vector<16x32xbf16>
    %cst = arith.constant dense<0.000000e+00> : vector<16x128xf32>
    %11 = tpu.matmul %10, %9, %cst {dimension_numbers = #tpu.dot_dimension_numbers<[1], [0], [0], [1], [0, 0, 1, 1], [], []>} : vector<16x32xbf16>, vector<32x128xbf16>, vector<16x128xf32> -> vector<16x128xf32>
    %c0_7 = arith.constant 0 : index
    %c0_8 = arith.constant 0 : index
    %12 = vector.load %arg4[%c0_7, %c0_8] : memref<16x16xf32, #tpu.memory_space<vmem>>, vector<16x16xf32>
    %c0_9 = arith.constant 0 : index
    %c0_10 = arith.constant 0 : index
    %c0_11 = arith.constant 0 : index
    %13 = vector.load %arg5[%c0_9, %c0_10, %c0_11] : memref<1x16x128xf32, #tpu.memory_space<vmem>>, vector<1x16x128xf32>
    %14 = vector.shape_cast %13 : vector<1x16x128xf32> to vector<16x128xf32>
    %cst_12 = arith.constant dense<0.000000e+00> : vector<16x128xf32>
    %15 = tpu.matmul %12, %14, %cst_12 {dimension_numbers = #tpu.dot_dimension_numbers<[1], [0], [0], [1], [0, 0, 1, 1], [], []>} : vector<16x16xf32>, vector<16x128xf32>, vector<16x128xf32> -> vector<16x128xf32>
    %16 = arith.addf %11, %15 : vector<16x128xf32>
    %17 = arith.truncf %16 : vector<16x128xf32> to vector<16x128xbf16>
    %c0_13 = arith.constant 0 : index
    %c0_14 = arith.constant 0 : index
    %c0_15 = arith.constant 0 : index
    %18 = vector.load %arg6[%c0_13, %c0_14, %c0_15] : memref<1x128x128xbf16, #tpu.memory_space<vmem>>, vector<1x128x128xbf16>
    %19 = vector.shape_cast %18 : vector<1x128x128xbf16> to vector<128x128xbf16>
    %cst_16 = arith.constant dense<0.000000e+00> : vector<16x128xf32>
    %20 = tpu.matmul %17, %19, %cst_16 {dimension_numbers = #tpu.dot_dimension_numbers<[1], [0], [0], [1], [0, 0, 1, 1], [], []>} : vector<16x128xbf16>, vector<128x128xbf16>, vector<16x128xf32> -> vector<16x128xf32>
    %c0_17 = arith.constant 0 : index
    %c0_18 = arith.constant 0 : index
    %c0_19 = arith.constant 0 : index
    %21 = vector.load %arg7[%c0_17, %c0_18, %c0_19] : memref<1x1x128xf32, #tpu.memory_space<vmem>>, vector<1x1x128xf32>
    %22 = vector.shape_cast %21 : vector<1x1x128xf32> to vector<1x128xf32>
    %23 = vector.broadcast %22 : vector<1x128xf32> to vector<16x128xf32>
    %24 = arith.addf %20, %23 : vector<16x128xf32>
    %cst_20 = arith.constant 0.000000e+00 : f32
    %25 = vector.broadcast %cst_20 : f32 to vector<16x128xf32>
    %26 = arith.maximumf %24, %25 : vector<16x128xf32>
    %27 = arith.truncf %26 : vector<16x128xf32> to vector<16x128xbf16>
    %c0_21 = arith.constant 0 : index
    %c0_22 = arith.constant 0 : index
    %c0_23 = arith.constant 0 : index
    %28 = vector.load %arg8[%c0_21, %c0_22, %c0_23] : memref<1x128x128xbf16, #tpu.memory_space<vmem>>, vector<1x128x128xbf16>
    %29 = vector.shape_cast %28 : vector<1x128x128xbf16> to vector<128x128xbf16>
    %cst_24 = arith.constant dense<0.000000e+00> : vector<16x128xf32>
    %30 = tpu.matmul %27, %29, %cst_24 {dimension_numbers = #tpu.dot_dimension_numbers<[1], [0], [0], [1], [0, 0, 1, 1], [], []>} : vector<16x128xbf16>, vector<128x128xbf16>, vector<16x128xf32> -> vector<16x128xf32>
    %c0_25 = arith.constant 0 : index
    %c0_26 = arith.constant 0 : index
    %c0_27 = arith.constant 0 : index
    %31 = vector.load %arg9[%c0_25, %c0_26, %c0_27] : memref<1x1x128xf32, #tpu.memory_space<vmem>>, vector<1x1x128xf32>
    %32 = vector.shape_cast %31 : vector<1x1x128xf32> to vector<1x128xf32>
    %33 = vector.broadcast %32 : vector<1x128xf32> to vector<16x128xf32>
    %34 = arith.addf %30, %33 : vector<16x128xf32>
    %c16_i32 = arith.constant 16 : i32
    %35 = arith.muli %arg1, %c16_i32 : i32
    %36 = tpu.assume_multiple %35, 16 : i32
    %37 = arith.index_cast %36 : i32 to index
    %c0_28 = arith.constant 0 : index
    %38 = vector.load %arg14[%37, %c0_28] : memref<32x128xf32, #tpu.memory_space<vmem>>, vector<16x128xf32>
    tpu.vector_store %arg14[%37, %c0_28], %34 {strides = array<i32>} : memref<32x128xf32, #tpu.memory_space<vmem>>, vector<16x128xf32>,
    %39 = tpu.iota {dimensions = array<i32: 0>} : vector<16x128xi32>
    %c16_i32_29 = arith.constant 16 : i32
    %40 = arith.muli %arg1, %c16_i32_29 : i32
    %41 = vector.broadcast %40 : i32 to vector<16x128xi32>
    %42 = arith.addi %39, %41 : vector<16x128xi32>
    %c32_i32 = arith.constant 32 : i32
    %43 = vector.broadcast %c32_i32 : i32 to vector<16x128xi32>
    %44 = arith.cmpi slt, %42, %43 : vector<16x128xi32>
    %cst_30 = arith.constant 0.000000e+00 : f32
    %45 = vector.broadcast %cst_30 : f32 to vector<16x128xf32>
    %46 = arith.select %44, %34, %45 : vector<16x128xi1>, vector<16x128xf32>
    %c0_31 = arith.constant 0 : index
    %c0_32 = arith.constant 0 : index
    %47 = vector.load %arg15[%c0_31, %c0_32] : memref<2x128xf32, #tpu.memory_space<vmem>>, vector<1x128xf32>
    %cst_33 = arith.constant dense<0.000000e+00> : vector<128xf32>
    %48 = vector.multi_reduction <add>, %46, %cst_33 [0] : vector<16x128xf32> to vector<128xf32>
    %49 = vector.shape_cast %48 : vector<128xf32> to vector<1x128xf32>
    %50 = arith.addf %47, %49 : vector<1x128xf32>
    %c0_34 = arith.constant 0 : index
    %c0_35 = arith.constant 0 : index
    %51 = vector.load %arg15[%c0_34, %c0_35] : memref<2x128xf32, #tpu.memory_space<vmem>>, vector<1x128xf32>
    tpu.vector_store %arg15[%c0_34, %c0_35], %50 {strides = array<i32>} : memref<2x128xf32, #tpu.memory_space<vmem>>, vector<1x128xf32>,
    %c1 = arith.constant 1 : index
    %c0_36 = arith.constant 0 : index
    %52 = vector.load %arg15[%c1, %c0_36] : memref<2x128xf32, #tpu.memory_space<vmem>>, vector<1x128xf32>
    %53 = arith.mulf %46, %46 : vector<16x128xf32>
    %cst_37 = arith.constant dense<0.000000e+00> : vector<128xf32>
    %54 = vector.multi_reduction <add>, %53, %cst_37 [0] : vector<16x128xf32> to vector<128xf32>
    %55 = vector.shape_cast %54 : vector<128xf32> to vector<1x128xf32>
    %56 = arith.addf %52, %55 : vector<1x128xf32>
    %c1_38 = arith.constant 1 : index
    %c0_39 = arith.constant 0 : index
    %57 = vector.load %arg15[%c1_38, %c0_39] : memref<2x128xf32, #tpu.memory_space<vmem>>, vector<1x128xf32>
    tpu.vector_store %arg15[%c1_38, %c0_39], %56 {strides = array<i32>} : memref<2x128xf32, #tpu.memory_space<vmem>>, vector<1x128xf32>,
    %c1_i32 = arith.constant 1 : i32
    %58 = arith.cmpi eq, %arg1, %c1_i32 : i32
    %59 = arith.extui %58 : i1 to i32
    %c0_i32_40 = arith.constant 0 : i32
    %60 = arith.cmpi ne, %59, %c0_i32_40 : i32
    scf.if %60 {
      %c0_41 = arith.constant 0 : index
      %c0_42 = arith.constant 0 : index
      %61 = vector.load %arg15[%c0_41, %c0_42] : memref<2x128xf32, #tpu.memory_space<vmem>>, vector<1x128xf32>
      %cst_43 = arith.constant 3.125000e-02 : f32
      %62 = vector.broadcast %cst_43 : f32 to vector<1x128xf32>
      %63 = arith.mulf %61, %62 : vector<1x128xf32>
      %c1_44 = arith.constant 1 : index
      %c0_45 = arith.constant 0 : index
      %64 = vector.load %arg15[%c1_44, %c0_45] : memref<2x128xf32, #tpu.memory_space<vmem>>, vector<1x128xf32>
      %cst_46 = arith.constant 3.125000e-02 : f32
      %65 = vector.broadcast %cst_46 : f32 to vector<1x128xf32>
      %66 = arith.mulf %64, %65 : vector<1x128xf32>
      %67 = arith.mulf %63, %63 : vector<1x128xf32>
      %68 = arith.subf %66, %67 : vector<1x128xf32>
      %c0_47 = arith.constant 0 : index
      %c0_48 = arith.constant 0 : index
      %69 = vector.load %arg14[%c0_47, %c0_48] : memref<32x128xf32, #tpu.memory_space<vmem>>, vector<32x128xf32>
      %70 = vector.broadcast %63 : vector<1x128xf32> to vector<32x128xf32>
      %71 = arith.subf %69, %70 : vector<32x128xf32>
      %cst_49 = arith.constant 9.99999974E-6 : f32
      %72 = vector.broadcast %cst_49 : f32 to vector<1x128xf32>
      %73 = arith.addf %68, %72 : vector<1x128xf32>
      %74 = math.rsqrt %73 : vector<1x128xf32>
      %75 = vector.broadcast %74 : vector<1x128xf32> to vector<32x128xf32>
      %76 = arith.mulf %71, %75 : vector<32x128xf32>
      %c0_50 = arith.constant 0 : index
      %c0_51 = arith.constant 0 : index
      %c0_52 = arith.constant 0 : index
      %77 = vector.load %arg10[%c0_50, %c0_51, %c0_52] : memref<1x1x128xf32, #tpu.memory_space<vmem>>, vector<1x1x128xf32>
      %78 = vector.shape_cast %77 : vector<1x1x128xf32> to vector<1x128xf32>
      %79 = vector.broadcast %78 : vector<1x128xf32> to vector<32x128xf32>
      %80 = arith.mulf %76, %79 : vector<32x128xf32>
      %c0_53 = arith.constant 0 : index
      %c0_54 = arith.constant 0 : index
      %c0_55 = arith.constant 0 : index
      %81 = vector.load %arg11[%c0_53, %c0_54, %c0_55] : memref<1x1x128xf32, #tpu.memory_space<vmem>>, vector<1x1x128xf32>
      %82 = vector.shape_cast %81 : vector<1x1x128xf32> to vector<1x128xf32>
      %83 = vector.broadcast %82 : vector<1x128xf32> to vector<32x128xf32>
      %84 = arith.addf %80, %83 : vector<32x128xf32>
      %c2_i32 = arith.constant 2 : i32
      %85 = arith.cmpi eq, %arg0, %c2_i32 : i32
      %cst_56 = arith.constant 0.000000e+00 : f32
      %86 = vector.broadcast %cst_56 : f32 to vector<32x128xf32>
      %87 = arith.maximumf %84, %86 : vector<32x128xf32>
      %88 = arith.select %85, %84, %87 : vector<32x128xf32>
      %c0_57 = arith.constant 0 : index
      %c0_58 = arith.constant 0 : index
      %89 = vector.load %arg13[%c0_57, %c0_58] : memref<32x128xf32, #tpu.memory_space<vmem>>, vector<32x128xf32>
      tpu.vector_store %arg13[%c0_57, %c0_58], %88 {strides = array<i32>} : memref<32x128xf32, #tpu.memory_space<vmem>>, vector<32x128xf32>,
      %c0_59 = arith.constant 0 : index
      %c0_60 = arith.constant 0 : index
      %90 = vector.load %arg12[%c0_59, %c0_60] : memref<32x128xf32, #tpu.memory_space<vmem>>, vector<32x128xf32>
      tpu.vector_store %arg12[%c0_59, %c0_60], %88 {strides = array<i32>} : memref<32x128xf32, #tpu.memory_space<vmem>>, vector<32x128xf32>,
    } else {
    }
    return
  }
  func.func @transform_0(%arg0: i32, %arg1: i32) -> (i32, i32) {
    %c0_i32 = arith.constant 0 : i32
    %c0_i32_0 = arith.constant 0 : i32
    %c0_i32_1 = arith.constant 0 : i32
    return %c0_i32, %c0_i32_0 : i32, i32
  }
  func.func @transform_1(%arg0: i32, %arg1: i32) -> (i32, i32) {
    %c0_i32 = arith.constant 0 : i32
    %c0_i32_0 = arith.constant 0 : i32
    return %arg1, %c0_i32 : i32, i32
  }
  func.func @transform_2(%arg0: i32, %arg1: i32) -> (i32, i32) {
    %c0_i32 = arith.constant 0 : i32
    %c0_i32_0 = arith.constant 0 : i32
    return %arg1, %c0_i32 : i32, i32
  }
  func.func @transform_3(%arg0: i32, %arg1: i32) -> (i32, i32, i32) {
    %c0_i32 = arith.constant 0 : i32
    %c0_i32_0 = arith.constant 0 : i32
    %c0_i32_1 = arith.constant 0 : i32
    return %arg0, %c0_i32, %c0_i32_0 : i32, i32, i32
  }
  func.func @transform_4(%arg0: i32, %arg1: i32) -> (i32, i32, i32) {
    %c0_i32 = arith.constant 0 : i32
    %c0_i32_0 = arith.constant 0 : i32
    %c0_i32_1 = arith.constant 0 : i32
    return %arg0, %c0_i32, %c0_i32_0 : i32, i32, i32
  }
  func.func @transform_5(%arg0: i32, %arg1: i32) -> (i32, i32, i32) {
    %c0_i32 = arith.constant 0 : i32
    %c0_i32_0 = arith.constant 0 : i32
    %c0_i32_1 = arith.constant 0 : i32
    return %arg0, %c0_i32, %c0_i32_0 : i32, i32, i32
  }
  func.func @transform_6(%arg0: i32, %arg1: i32) -> (i32, i32, i32) {
    %c0_i32 = arith.constant 0 : i32
    %c0_i32_0 = arith.constant 0 : i32
    %c0_i32_1 = arith.constant 0 : i32
    return %arg0, %c0_i32, %c0_i32_0 : i32, i32, i32
  }
  func.func @transform_7(%arg0: i32, %arg1: i32) -> (i32, i32, i32) {
    %c0_i32 = arith.constant 0 : i32
    %c0_i32_0 = arith.constant 0 : i32
    %c0_i32_1 = arith.constant 0 : i32
    return %arg0, %c0_i32, %c0_i32_0 : i32, i32, i32
  }
  func.func @transform_8(%arg0: i32, %arg1: i32) -> (i32, i32, i32) {
    %c0_i32 = arith.constant 0 : i32
    %c0_i32_0 = arith.constant 0 : i32
    %c0_i32_1 = arith.constant 0 : i32
    return %arg0, %c0_i32, %c0_i32_0 : i32, i32, i32
  }
  func.func @transform_9(%arg0: i32, %arg1: i32) -> (i32, i32, i32) {
    %c0_i32 = arith.constant 0 : i32
    %c0_i32_0 = arith.constant 0 : i32
    %c0_i32_1 = arith.constant 0 : i32
    return %arg0, %c0_i32, %c0_i32_0 : i32, i32, i32
  }
  func.func @transform_10(%arg0: i32, %arg1: i32) -> (i32, i32) {
    %c0_i32 = arith.constant 0 : i32
    %c0_i32_0 = arith.constant 0 : i32
    %c0_i32_1 = arith.constant 0 : i32
    return %c0_i32, %c0_i32_0 : i32, i32
  }
}

</mosaic_0001>

<llo_original>
// kernel: tpu_custom_call.1
$region0: #{tpu_custom_call.1}
  #allocation0 [shape = 'u32[]', space=smem, size = 0x4, offset = 0x4, fixed_abs, tag = 'smem constant byte address 0x4 - core index']
  #allocation1 [shape = 'u32[144,128]{1,0:T(1,128)}', space=vmem, size = 0x12000, scoped, tag = 'internal scratch']
  #allocation2 [shape = 'f32[32,128]{1,0:T(8,128)}', space=vmem, size = 0x4000, scoped, tag = 'scratch operand']
  #allocation3 [shape = 'f32[32,128]{1,0:T(8,128)}', space=vmem, size = 0x4000, scoped, tag = 'scratch operand']
  #allocation4 [shape = 'f32[2,128]{1,0:T(2,128)}', space=vmem, size = 0x400, scoped, tag = 'scratch operand']
  %s0 = inlined_call_operand.hbm [shape: f32[32,128], index: 0, kind: input, shape index: {}]
  %s1 = inlined_call_operand.hbm [shape: bf16[32,32], index: 1, kind: input, shape index: {}]
  %s2 = inlined_call_operand.vmem [shape: f32[32,16], index: 2, kind: input, shape index: {}]
  %s3 = inlined_call_operand.vmem [shape: f32[3,16,128], index: 3, kind: input, shape index: {}]
  %s4 = inlined_call_operand.hbm [shape: bf16[3,128,128], index: 4, kind: input, shape index: {}]
  %s5 = inlined_call_operand.vmem [shape: f32[3,1,128], index: 5, kind: input, shape index: {}]
  %s6 = inlined_call_operand.hbm [shape: bf16[3,128,128], index: 6, kind: input, shape index: {}]
  %s7 = inlined_call_operand.vmem [shape: f32[3,1,128], index: 7, kind: input, shape index: {}]
  %s8 = inlined_call_operand.vmem [shape: f32[3,1,128], index: 8, kind: input, shape index: {}]
  %s9 = inlined_call_operand.vmem [shape: f32[3,1,128], index: 9, kind: input, shape index: {}]
  %s10 = inlined_call_operand.hbm [shape: f32[32,128], index: 10, kind: output, shape index: {}]
  %s11 = sld [smem:[#allocation0]]
  $region101: #{tpu_custom_call.1} parent=0
    _
  %s13 = ssub.s32 1, %s11
  %s14 = scalar_select 0, %s13, %s11
  $region1: #{tpu_custom_call.1} parent=0
    #allocation5 [shape = 'u8[16384]{0}', space=vmem, size = 0x4000, scoped, tag = 'input window, operand 0, single buffered']
    #allocation6 [shape = 's32[2]{0}', space=sflag, size = 0x8, scoped, tag = 'scoped memory for tpu_custom_call.1']
    #allocation7 [shape = 's32[2]{0}', space=sflag, size = 0x8, scoped, tag = 'scoped memory for tpu_custom_call.1']
    #allocation8 [shape = 'u8[8192]{0}', space=vmem, size = 0x2000, scoped, tag = 'input window, operand 1']
    #allocation9 [shape = 's32[2]{0}', space=sflag, size = 0x8, scoped, tag = 'scoped memory for tpu_custom_call.1']
    #allocation10 [shape = 'u8[65536]{0}', space=vmem, size = 0x10000, scoped, tag = 'input window, operand 4']
    #allocation11 [shape = 'u8[65536]{0}', space=vmem, size = 0x10000, scoped, tag = 'input window, operand 6']
    #allocation12 [shape = 's32[2]{0}', space=sflag, size = 0x8, scoped, tag = 'scoped memory for tpu_custom_call.1']
    #allocation13 [shape = 'u8[16384]{0}', space=vmem, size = 0x4000, scoped, tag = 'output window, operand 0, single buffered']
    %15 = vsyncpa [#allocation6], 0
    %16 = vsyncpa [#allocation9], 0
    %s17 = scalar_lea.sflag [#allocation9], 1
    %18 = vsyncpa %s17, 0
    %19 = vsyncpa [#allocation12], 0
    %s20 = scalar_lea.sflag [#allocation12], 1
    %21 = vsyncpa %s20, 0
    %22 = vsyncpa [#allocation7], 0
    loop: start=0, step=1, limit=8
    $region2: #{tpu_custom_call.1} parent=1 // loop_pre_header
      _
    $region3: #{tpu_custom_call.1} parent=1 // loop_header
      %s24 = sphi 0, %s28
      %p25 = scmp.ge.s32.totalorder %s24, 8
      %s31 = sphi 0, %s43
      %s32 = sphi 0, %s39
      %s33 = sphi 0, %s31
      %s34 = sphi 0, %s32
      %s35 = sphi 0, %s33
      %s36 = sphi 0, %s34
      %s44 = sphi 0, %s44
      %s46 = sphi 0, %s44
      %s47 = sphi 0, %s46
      %s61 = sphi 0, %s47
      %s67 = sphi 0, %s69
      %s70 = sphi 0, %s67
      %s71 = sphi 0, %s70
      %s87 = sphi 0, %s71
      %s93 = sphi 0, %s95
      %s96 = sphi 0, %s93
      %s97 = sphi 0, %s96
      %s113 = sphi 0, %s97
      %s119 = sphi 0, %s121
      %s122 = sphi 0, %s119
      %s123 = sphi 0, %s122
      %s139 = sphi 0, %s123
      %s145 = sphi 0, %s147
      %s148 = sphi 0, %s145
      %s149 = sphi 0, %s148
      %s165 = sphi 0, %s149
      %s171 = sphi 0, %s173
      %s174 = sphi 0, %s171
      %s175 = sphi 0, %s174
      %s191 = sphi 0, %s175
      %s197 = sphi 0, %s199
      %s200 = sphi 0, %s197
      %s201 = sphi 0, %s200
      %s217 = sphi 0, %s201
      %s223 = sphi 0, %s225
      %s226 = sphi 0, %s223
      %s227 = sphi 0, %s226
      %s243 = sphi 0, %s227
      %s249 = sphi 0, %s251
      %s252 = sphi 0, %s249
      %s253 = sphi 0, %s252
      %s269 = sphi 0, %s253
      %s275 = sphi 0, %s277
      %s278 = sphi 0, %s275
      %s279 = sphi 0, %s278
      %s295 = sphi 0, %s279
      %s299 = sphi 0, %s299
      %s301 = sphi 0, %s299
      %s302 = sphi 0, %s301
      %s316 = sphi 0, %s302
    $region4: #{tpu_custom_call.1} parent=1 // loop_header_branch
      %27 = sbr.rel (%p25) target = $region8
    $region5: #{tpu_custom_call.1} parent=1 // loop_body
      %s29 = ssub.s32 %s24, 1
      %s30 = ssub.s32 %s24, 2
      %s37 = sadd.s32 1, %s32
      %p38 = scmp.ge.s32.totalorder %s37, 2
      %s39 = scalar_select %p38, 0, %s37
      %s40 = sadd.s32 1, %s31
      %s41 = scalar_select %p38, %s40, %s31
      %p42 = scmp.ge.s32.totalorder %s41, 3
      %s43 = scalar_select %p42, 0, %s41
      %s45 = sadd.s32 %s44, 1
      %p48 = scmp.eq.s32.totalorder %s24, 5
      %p49 = scmp.ne.s32.totalorder %s44, %s46
      %p50 = scmp.eq.s32.totalorder %s24, 0
      %p51 = por %p49, %p50
      %p52 = scmp.ne.s32.totalorder %s44, %s46
      %p53 = scmp.eq.s32.totalorder %s29, 5
      %p54 = por %p52, %p53
      %p55 = scmp.ne.s32.totalorder %s46, %s47
      %p56 = scmp.eq.s32.totalorder %s29, 0
      %p57 = por %p55, %p56
      %p58 = scmp.ne.s32.totalorder %s46, %s47
      %p59 = scmp.eq.s32.totalorder %s30, 5
      %p60 = por %p58, %p59
      %p62 = scmp.ne.s32.totalorder %s47, %s61
      %p63 = scmp.eq.s32.totalorder %s30, 0
      %p64 = por %p62, %p63
      %s65 = ssub.s32 %s32, %s39
      %p66 = scmp.eq.s32.totalorder %s65, 0
      %s68 = sadd.s32 %s67, 1
      %s69 = scalar_select %p66, %s67, %s68
      %p72 = pneg %p66
      %p73 = scmp.eq.s32.totalorder %s24, 5
      %p74 = por %p72, %p73
      %p75 = scmp.ne.s32.totalorder %s67, %s70
      %p76 = scmp.eq.s32.totalorder %s24, 0
      %p77 = por %p75, %p76
      %p78 = scmp.ne.s32.totalorder %s67, %s70
      %p79 = scmp.eq.s32.totalorder %s29, 5
      %p80 = por %p78, %p79
      %p81 = scmp.ne.s32.totalorder %s70, %s71
      %p82 = scmp.eq.s32.totalorder %s29, 0
      %p83 = por %p81, %p82
      %p84 = scmp.ne.s32.totalorder %s70, %s71
      %p85 = scmp.eq.s32.totalorder %s30, 5
      %p86 = por %p84, %p85
      %p88 = scmp.ne.s32.totalorder %s71, %s87
      %p89 = scmp.eq.s32.totalorder %s30, 0
      %p90 = por %p88, %p89
      %s91 = ssub.s32 %s32, %s39
      %p92 = scmp.eq.s32.totalorder %s91, 0
      %s94 = sadd.s32 %s93, 1
      %s95 = scalar_select %p92, %s93, %s94
      %p98 = pneg %p92
      %p99 = scmp.eq.s32.totalorder %s24, 5
      %p100 = por %p98, %p99
      %p101 = scmp.ne.s32.totalorder %s93, %s96
      %p102 = scmp.eq.s32.totalorder %s24, 0
      %p103 = por %p101, %p102
      %p104 = scmp.ne.s32.totalorder %s93, %s96
      %p105 = scmp.eq.s32.totalorder %s29, 5
      %p106 = por %p104, %p105
      %p107 = scmp.ne.s32.totalorder %s96, %s97
      %p108 = scmp.eq.s32.totalorder %s29, 0
      %p109 = por %p107, %p108
      %p110 = scmp.ne.s32.totalorder %s96, %s97
      %p111 = scmp.eq.s32.totalorder %s30, 5
      %p112 = por %p110, %p111
      %p114 = scmp.ne.s32.totalorder %s97, %s113
      %p115 = scmp.eq.s32.totalorder %s30, 0
      %p116 = por %p114, %p115
      %s117 = ssub.s32 %s31, %s43
      %p118 = scmp.eq.s32.totalorder %s117, 0
      %s120 = sadd.s32 %s119, 1
      %s121 = scalar_select %p118, %s119, %s120
      %p124 = pneg %p118
      %p125 = scmp.eq.s32.totalorder %s24, 5
      %p126 = por %p124, %p125
      %p127 = scmp.ne.s32.totalorder %s119, %s122
      %p128 = scmp.eq.s32.totalorder %s24, 0
      %p129 = por %p127, %p128
      %p130 = scmp.ne.s32.totalorder %s119, %s122
      %p131 = scmp.eq.s32.totalorder %s29, 5
      %p132 = por %p130, %p131
      %p133 = scmp.ne.s32.totalorder %s122, %s123
      %p134 = scmp.eq.s32.totalorder %s29, 0
      %p135 = por %p133, %p134
      %p136 = scmp.ne.s32.totalorder %s122, %s123
      %p137 = scmp.eq.s32.totalorder %s30, 5
      %p138 = por %p136, %p137
      %p140 = scmp.ne.s32.totalorder %s123, %s139
      %p141 = scmp.eq.s32.totalorder %s30, 0
      %p142 = por %p140, %p141
      %s143 = ssub.s32 %s31, %s43
      %p144 = scmp.eq.s32.totalorder %s143, 0
      %s146 = sadd.s32 %s145, 1
      %s147 = scalar_select %p144, %s145, %s146
      %p150 = pneg %p144
      %p151 = scmp.eq.s32.totalorder %s24, 5
      %p152 = por %p150, %p151
      %p153 = scmp.ne.s32.totalorder %s145, %s148
      %p154 = scmp.eq.s32.totalorder %s24, 0
      %p155 = por %p153, %p154
      %p156 = scmp.ne.s32.totalorder %s145, %s148
      %p157 = scmp.eq.s32.totalorder %s29, 5
      %p158 = por %p156, %p157
      %p159 = scmp.ne.s32.totalorder %s148, %s149
      %p160 = scmp.eq.s32.totalorder %s29, 0
      %p161 = por %p159, %p160
      %p162 = scmp.ne.s32.totalorder %s148, %s149
      %p163 = scmp.eq.s32.totalorder %s30, 5
      %p164 = por %p162, %p163
      %p166 = scmp.ne.s32.totalorder %s149, %s165
      %p167 = scmp.eq.s32.totalorder %s30, 0
      %p168 = por %p166, %p167
      %s169 = ssub.s32 %s31, %s43
      %p170 = scmp.eq.s32.totalorder %s169, 0
      %s172 = sadd.s32 %s171, 1
      %s173 = scalar_select %p170, %s171, %s172
      %p176 = pneg %p170
      %p177 = scmp.eq.s32.totalorder %s24, 5
      %p178 = por %p176, %p177
      %p179 = scmp.ne.s32.totalorder %s171, %s174
      %p180 = scmp.eq.s32.totalorder %s24, 0
      %p181 = por %p179, %p180
      %p182 = scmp.ne.s32.totalorder %s171, %s174
      %p183 = scmp.eq.s32.totalorder %s29, 5
      %p184 = por %p182, %p183
      %p185 = scmp.ne.s32.totalorder %s174, %s175
      %p186 = scmp.eq.s32.totalorder %s29, 0
      %p187 = por %p185, %p186
      %p188 = scmp.ne.s32.totalorder %s174, %s175
      %p189 = scmp.eq.s32.totalorder %s30, 5
      %p190 = por %p188, %p189
      %p192 = scmp.ne.s32.totalorder %s175, %s191
      %p193 = scmp.eq.s32.totalorder %s30, 0
      %p194 = por %p192, %p193
      %s195 = ssub.s32 %s31, %s43
      %p196 = scmp.eq.s32.totalorder %s195, 0
      %s198 = sadd.s32 %s197, 1
      %s199 = scalar_select %p196, %s197, %s198
      %p202 = pneg %p196
      %p203 = scmp.eq.s32.totalorder %s24, 5
      %p204 = por %p202, %p203
      %p205 = scmp.ne.s32.totalorder %s197, %s200
      %p206 = scmp.eq.s32.totalorder %s24, 0
      %p207 = por %p205, %p206
      %p208 = scmp.ne.s32.totalorder %s197, %s200
      %p209 = scmp.eq.s32.totalorder %s29, 5
      %p210 = por %p208, %p209
      %p211 = scmp.ne.s32.totalorder %s200, %s201
      %p212 = scmp.eq.s32.totalorder %s29, 0
      %p213 = por %p211, %p212
      %p214 = scmp.ne.s32.totalorder %s200, %s201
      %p215 = scmp.eq.s32.totalorder %s30, 5
      %p216 = por %p214, %p215
      %p218 = scmp.ne.s32.totalorder %s201, %s217
      %p219 = scmp.eq.s32.totalorder %s30, 0
      %p220 = por %p218, %p219
      %s221 = ssub.s32 %s31, %s43
      %p222 = scmp.eq.s32.totalorder %s221, 0
      %s224 = sadd.s32 %s223, 1
      %s225 = scalar_select %p222, %s223, %s224
      %p228 = pneg %p222
      %p229 = scmp.eq.s32.totalorder %s24, 5
      %p230 = por %p228, %p229
      %p231 = scmp.ne.s32.totalorder %s223, %s226
      %p232 = scmp.eq.s32.totalorder %s24, 0
      %p233 = por %p231, %p232
      %p234 = scmp.ne.s32.totalorder %s223, %s226
      %p235 = scmp.eq.s32.totalorder %s29, 5
      %p236 = por %p234, %p235
      %p237 = scmp.ne.s32.totalorder %s226, %s227
      %p238 = scmp.eq.s32.totalorder %s29, 0
      %p239 = por %p237, %p238
      %p240 = scmp.ne.s32.totalorder %s226, %s227
      %p241 = scmp.eq.s32.totalorder %s30, 5
      %p242 = por %p240, %p241
      %p244 = scmp.ne.s32.totalorder %s227, %s243
      %p245 = scmp.eq.s32.totalorder %s30, 0
      %p246 = por %p244, %p245
      %s247 = ssub.s32 %s31, %s43
      %p248 = scmp.eq.s32.totalorder %s247, 0
      %s250 = sadd.s32 %s249, 1
      %s251 = scalar_select %p248, %s249, %s250
      %p254 = pneg %p248
      %p255 = scmp.eq.s32.totalorder %s24, 5
      %p256 = por %p254, %p255
      %p257 = scmp.ne.s32.totalorder %s249, %s252
      %p258 = scmp.eq.s32.totalorder %s24, 0
      %p259 = por %p257, %p258
      %p260 = scmp.ne.s32.totalorder %s249, %s252
      %p261 = scmp.eq.s32.totalorder %s29, 5
      %p262 = por %p260, %p261
      %p263 = scmp.ne.s32.totalorder %s252, %s253
      %p264 = scmp.eq.s32.totalorder %s29, 0
      %p265 = por %p263, %p264
      %p266 = scmp.ne.s32.totalorder %s252, %s253
      %p267 = scmp.eq.s32.totalorder %s30, 5
      %p268 = por %p266, %p267
      %p270 = scmp.ne.s32.totalorder %s253, %s269
      %p271 = scmp.eq.s32.totalorder %s30, 0
      %p272 = por %p270, %p271
      %s273 = ssub.s32 %s31, %s43
      %p274 = scmp.eq.s32.totalorder %s273, 0
      %s276 = sadd.s32 %s275, 1
      %s277 = scalar_select %p274, %s275, %s276
      %p280 = pneg %p274
      %p281 = scmp.eq.s32.totalorder %s24, 5
      %p282 = por %p280, %p281
      %p283 = scmp.ne.s32.totalorder %s275, %s278
      %p284 = scmp.eq.s32.totalorder %s24, 0
      %p285 = por %p283, %p284
      %p286 = scmp.ne.s32.totalorder %s275, %s278
      %p287 = scmp.eq.s32.totalorder %s29, 5
      %p288 = por %p286, %p287
      %p289 = scmp.ne.s32.totalorder %s278, %s279
      %p290 = scmp.eq.s32.totalorder %s29, 0
      %p291 = por %p289, %p290
      %p292 = scmp.ne.s32.totalorder %s278, %s279
      %p293 = scmp.eq.s32.totalorder %s30, 5
      %p294 = por %p292, %p293
      %p296 = scmp.ne.s32.totalorder %s279, %s295
      %p297 = scmp.eq.s32.totalorder %s30, 0
      %p298 = por %p296, %p297
      %s300 = sadd.s32 %s299, 1
      %p303 = scmp.eq.s32.totalorder %s24, 5
      %p304 = scmp.ne.s32.totalorder %s299, %s301
      %p305 = scmp.eq.s32.totalorder %s24, 0
      %p306 = por %p304, %p305
      %p307 = scmp.ne.s32.totalorder %s299, %s301
      %p308 = scmp.eq.s32.totalorder %s29, 5
      %p309 = por %p307, %p308
      %p310 = scmp.ne.s32.totalorder %s301, %s302
      %p311 = scmp.eq.s32.totalorder %s29, 0
      %p312 = por %p310, %p311
      %p313 = scmp.ne.s32.totalorder %s301, %s302
      %p314 = scmp.eq.s32.totalorder %s30, 5
      %p315 = por %p313, %p314
      %p317 = scmp.ne.s32.totalorder %s302, %s316
      %p318 = scmp.eq.s32.totalorder %s30, 0
      %p319 = por %p317, %p318
      %p320 = scmp.le.s32.totalorder 1, %s24
      %p321 = scmp.lt.s32.totalorder %s24, 7
      %p322 = pnand %p320, %p321
      %p323 = pneg %p322
      // Predicated region
      $region9: #{tpu_custom_call.1} parent=5 // pred_check
        _
      $region10: #{tpu_custom_call.1} parent=5 // pred_check_branch
        %325 = sbr.rel (%p322) target = $region12
      $region11: #{tpu_custom_call.1} parent=5 // pred_region
        %s326 = ssub.s32 %s24, 1
        // Predicated region
        $region13: #{tpu_custom_call.1} parent=11 // pred_check
          %p327 = pneg %p57
        $region14: #{tpu_custom_call.1} parent=11 // pred_check_branch
          %329 = sbr.rel (%p327) target = $region16
        $region15: #{tpu_custom_call.1} parent=11 // pred_region
          %s331 = ssub.s32 512, 512
          %332 = vsyncadd [#allocation6], %s331
          %s333 = sshll.u32 [#allocation5], 4
          %s334 = int_to_ptr.vmem [resolvable:$true] %s333
          %339 = dma.hbm_to_vmem [thread:$0]  %s0, 512, %s334, [#allocation6], 128, 128, 8
        $region16: #{tpu_custom_call.1} parent=11 // pred_fallthru
          _
      $region12: #{tpu_custom_call.1} parent=5 // pred_fallthru
        _
      %p340 = scmp.lt.s32.totalorder %s24, 6
      // Predicated region
      $region17: #{tpu_custom_call.1} parent=5 // pred_check
        %p341 = pneg %p340
      $region18: #{tpu_custom_call.1} parent=5 // pred_check_branch
        %343 = sbr.rel (%p341) target = $region20
      $region19: #{tpu_custom_call.1} parent=5 // pred_region
        // Predicated region
        $region21: #{tpu_custom_call.1} parent=19 // pred_check
          %p344 = pneg %p77
        $region22: #{tpu_custom_call.1} parent=19 // pred_check_branch
          %346 = sbr.rel (%p344) target = $region24
        $region23: #{tpu_custom_call.1} parent=19 // pred_region
          %s347 = sand.u32 %s24, 1
          %s348 = scalar_lea.sflag [#allocation9], %s347
          %s349 = sand.u32 %s67, 1
          %s350 = smul.addr %s349, 8
          %s351 = scalar_lea.vmem [#allocation8], %s350
          %s352 = smul.u32 2, %s32
          %s354 = ssub.s32 128, 128
          %355 = vsyncadd %s348, %s354
          %s356 = smul.addr %s352, 64
          %s357 = scalar_lea.hbm %s1, %s356
          %s358 = sshll.u32 %s351, 4
          %s359 = int_to_ptr.vmem [resolvable:$true] %s358
          %364 = dma.hbm_to_vmem [thread:$0]  %s357, 128, %s359, %s348, 64, 64, 4
        $region24: #{tpu_custom_call.1} parent=19 // pred_fallthru
          _
        // Predicated region
        $region25: #{tpu_custom_call.1} parent=19 // pred_check
          %p365 = pneg %p103
        $region26: #{tpu_custom_call.1} parent=19 // pred_check_branch
          %367 = sbr.rel (%p365) target = $region28
        $region27: #{tpu_custom_call.1} parent=19 // pred_region
          %s368 = smul.u32 2, %s32
          %p369 = scmp.lt.s32.totalorder %s368, 3
          %s370 = scalar_select %p369, %s368, 3
          %s371 = smul.addr %s370, 8
          %s372 = scalar_lea.vmem %s2, %s371
          %s373 = smul.u32 2, %s32
        $region28: #{tpu_custom_call.1} parent=19 // pred_fallthru
          _
        // Predicated region
        $region29: #{tpu_custom_call.1} parent=19 // pred_check
          %p374 = pneg %p129
        $region30: #{tpu_custom_call.1} parent=19 // pred_check_branch
          %376 = sbr.rel (%p374) target = $region32
        $region31: #{tpu_custom_call.1} parent=19 // pred_region
          %p377 = scmp.lt.s32.totalorder %s31, 2
          %s378 = scalar_select %p377, %s31, 2
          %s379 = smul.addr %s378, 2
          %s380 = smul.addr %s379, 8
          %s381 = scalar_lea.vmem %s3, %s380
        $region32: #{tpu_custom_call.1} parent=19 // pred_fallthru
          _
        // Predicated region
        $region33: #{tpu_custom_call.1} parent=19 // pred_check
          %p382 = pneg %p155
        $region34: #{tpu_custom_call.1} parent=19 // pred_check_branch
          %384 = sbr.rel (%p382) target = $region36
        $region35: #{tpu_custom_call.1} parent=19 // pred_region
          %s385 = sand.u32 %s24, 1
          %s386 = scalar_lea.sflag [#allocation9], %s385
          %s387 = sand.u32 %s145, 1
          %s388 = smul.addr %s387, 64
          %s389 = scalar_lea.vmem [#allocation10], %s388
          %s391 = ssub.s32 1024, 1024
          %392 = vsyncadd %s386, %s391
          %s393 = smul.addr %s31, 16
          %s394 = smul.addr %s393, 64
          %s395 = scalar_lea.hbm %s4, %s394
          %s396 = sshll.u32 %s389, 4
          %s397 = int_to_ptr.vmem [resolvable:$true] %s396
          %402 = dma.hbm_to_vmem [thread:$0]  %s395, 1024, %s397, %s386, 64, 64, 4
        $region36: #{tpu_custom_call.1} parent=19 // pred_fallthru
          _
        // Predicated region
        $region37: #{tpu_custom_call.1} parent=19 // pred_check
          %p403 = pneg %p181
        $region38: #{tpu_custom_call.1} parent=19 // pred_check_branch
          %405 = sbr.rel (%p403) target = $region40
        $region39: #{tpu_custom_call.1} parent=19 // pred_region
          %p406 = scmp.lt.s32.totalorder %s31, 2
          %s407 = scalar_select %p406, %s31, 2
          %s408 = scalar_lea.vmem %s5, %s407
        $region40: #{tpu_custom_call.1} parent=19 // pred_fallthru
          _
        // Predicated region
        $region41: #{tpu_custom_call.1} parent=19 // pred_check
          %p409 = pneg %p207
        $region42: #{tpu_custom_call.1} parent=19 // pred_check_branch
          %411 = sbr.rel (%p409) target = $region44
        $region43: #{tpu_custom_call.1} parent=19 // pred_region
          %s412 = sand.u32 %s197, 1
          %s413 = scalar_lea.sflag [#allocation12], %s412
          %s414 = sand.u32 %s197, 1
          %s415 = smul.addr %s414, 64
          %s416 = scalar_lea.vmem [#allocation11], %s415
          %s418 = ssub.s32 1024, 1024
          %419 = vsyncadd %s413, %s418
          %s420 = smul.addr %s31, 16
          %s421 = smul.addr %s420, 64
          %s422 = scalar_lea.hbm %s6, %s421
          %s423 = sshll.u32 %s416, 4
          %s424 = int_to_ptr.vmem [resolvable:$true] %s423
          %429 = dma.hbm_to_vmem [thread:$0]  %s422, 1024, %s424, %s413, 64, 64, 4
        $region44: #{tpu_custom_call.1} parent=19 // pred_fallthru
          _
        // Predicated region
        $region45: #{tpu_custom_call.1} parent=19 // pred_check
          %p430 = pneg %p233
        $region46: #{tpu_custom_call.1} parent=19 // pred_check_branch
          %432 = sbr.rel (%p430) target = $region48
        $region47: #{tpu_custom_call.1} parent=19 // pred_region
          %p433 = scmp.lt.s32.totalorder %s31, 2
          %s434 = scalar_select %p433, %s31, 2
          %s435 = scalar_lea.vmem %s7, %s434
        $region48: #{tpu_custom_call.1} parent=19 // pred_fallthru
          _
        // Predicated region
        $region49: #{tpu_custom_call.1} parent=19 // pred_check
          %p436 = pneg %p259
        $region50: #{tpu_custom_call.1} parent=19 // pred_check_branch
          %438 = sbr.rel (%p436) target = $region52
        $region51: #{tpu_custom_call.1} parent=19 // pred_region
          %p439 = scmp.lt.s32.totalorder %s31, 2
          %s440 = scalar_select %p439, %s31, 2
          %s441 = scalar_lea.vmem %s8, %s440
        $region52: #{tpu_custom_call.1} parent=19 // pred_fallthru
          _
        // Predicated region
        $region53: #{tpu_custom_call.1} parent=19 // pred_check
          %p442 = pneg %p285
        $region54: #{tpu_custom_call.1} parent=19 // pred_check_branch
          %444 = sbr.rel (%p442) target = $region56
        $region55: #{tpu_custom_call.1} parent=19 // pred_region
          %p445 = scmp.lt.s32.totalorder %s31, 2
          %s446 = scalar_select %p445, %s31, 2
          %s447 = scalar_lea.vmem %s9, %s446
        $region56: #{tpu_custom_call.1} parent=19 // pred_fallthru
          _
      $region20: #{tpu_custom_call.1} parent=5 // pred_fallthru
        _
      %p448 = scmp.le.s32.totalorder 1, %s24
      %p449 = scmp.lt.s32.totalorder %s24, 7
      %p450 = pnand %p448, %p449
      %p451 = pneg %p450
      // Predicated region
      $region57: #{tpu_custom_call.1} parent=5 // pred_check
        _
      $region58: #{tpu_custom_call.1} parent=5 // pred_check_branch
        %453 = sbr.rel (%p450) target = $region60
      $region59: #{tpu_custom_call.1} parent=5 // pred_region
        %s454 = ssub.s32 %s24, 1
        // Predicated region
        $region61: #{tpu_custom_call.1} parent=59 // pred_check
          %p455 = pneg %p57
        $region62: #{tpu_custom_call.1} parent=59 // pred_check_branch
          %457 = sbr.rel (%p455) target = $region64
        $region63: #{tpu_custom_call.1} parent=59 // pred_region
          %458 = dma.done [#allocation6], 512
        $region64: #{tpu_custom_call.1} parent=59 // pred_fallthru
          _
        %s459 = sand.u32 %s29, 1
        %s460 = scalar_lea.sflag [#allocation9], %s459
        %s461 = sand.u32 %s70, 1
        %s462 = smul.addr %s461, 8
        %s463 = scalar_lea.vmem [#allocation8], %s462
        // Predicated region
        $region65: #{tpu_custom_call.1} parent=59 // pred_check
          %p464 = pneg %p83
        $region66: #{tpu_custom_call.1} parent=59 // pred_check_branch
          %466 = sbr.rel (%p464) target = $region68
        $region67: #{tpu_custom_call.1} parent=59 // pred_region
          %467 = dma.done %s460, 128
        $region68: #{tpu_custom_call.1} parent=59 // pred_fallthru
          _
        %s468 = sand.u32 %s29, 1
        %s469 = scalar_lea.sflag [#allocation9], %s468
        %s470 = sand.u32 %s148, 1
        %s471 = smul.addr %s470, 64
        %s472 = scalar_lea.vmem [#allocation10], %s471
        // Predicated region
        $region69: #{tpu_custom_call.1} parent=59 // pred_check
          %p473 = pneg %p161
        $region70: #{tpu_custom_call.1} parent=59 // pred_check_branch
          %475 = sbr.rel (%p473) target = $region72
        $region71: #{tpu_custom_call.1} parent=59 // pred_region
          %476 = dma.done %s469, 1024
        $region72: #{tpu_custom_call.1} parent=59 // pred_fallthru
          _
        %s477 = sand.u32 %s200, 1
        %s478 = scalar_lea.sflag [#allocation12], %s477
        %s479 = sand.u32 %s200, 1
        %s480 = smul.addr %s479, 64
        %s481 = scalar_lea.vmem [#allocation11], %s480
        // Predicated region
        $region73: #{tpu_custom_call.1} parent=59 // pred_check
          %p482 = pneg %p213
        $region74: #{tpu_custom_call.1} parent=59 // pred_check_branch
          %484 = sbr.rel (%p482) target = $region76
        $region75: #{tpu_custom_call.1} parent=59 // pred_region
          %485 = dma.done %s478, 1024
        $region76: #{tpu_custom_call.1} parent=59 // pred_fallthru
          _
        %p486 = pneg %p57
        %p487 = pneg %p54
        %s488 = sand.u32 %s29, 1
        %s489 = scalar_lea.sflag [#allocation9], %s488
        %s490 = sand.u32 %s70, 1
        %s491 = smul.addr %s490, 8
        %s492 = scalar_lea.vmem [#allocation8], %s491
        %p493 = pneg %p83
        %p494 = pneg %p80
        %s495 = smul.u32 2, %s34
        %p496 = scmp.lt.s32.totalorder %s495, 3
        %s497 = scalar_select %p496, %s495, 3
        %s498 = smul.addr %s497, 8
        %s499 = scalar_lea.vmem %s2, %s498
        %p500 = pneg %p109
        %p501 = pneg %p106
        %p502 = scmp.lt.s32.totalorder %s33, 2
        %s503 = scalar_select %p502, %s33, 2
        %s504 = smul.addr %s503, 2
        %s505 = smul.addr %s504, 8
        %s506 = scalar_lea.vmem %s3, %s505
        %p507 = pneg %p135
        %p508 = pneg %p132
        %s509 = sand.u32 %s29, 1
        %s510 = scalar_lea.sflag [#allocation9], %s509
        %s511 = sand.u32 %s148, 1
        %s512 = smul.addr %s511, 64
        %s513 = scalar_lea.vmem [#allocation10], %s512
        %p514 = pneg %p161
        %p515 = pneg %p158
        %p516 = scmp.lt.s32.totalorder %s33, 2
        %s517 = scalar_select %p516, %s33, 2
        %s518 = scalar_lea.vmem %s5, %s517
        %p519 = pneg %p187
        %p520 = pneg %p184
        %s521 = sand.u32 %s200, 1
        %s522 = scalar_lea.sflag [#allocation12], %s521
        %s523 = sand.u32 %s200, 1
        %s524 = smul.addr %s523, 64
        %s525 = scalar_lea.vmem [#allocation11], %s524
        %p526 = pneg %p213
        %p527 = pneg %p210
        %p528 = scmp.lt.s32.totalorder %s33, 2
        %s529 = scalar_select %p528, %s33, 2
        %s530 = scalar_lea.vmem %s7, %s529
        %p531 = pneg %p239
        %p532 = pneg %p236
        %p533 = scmp.lt.s32.totalorder %s33, 2
        %s534 = scalar_select %p533, %s33, 2
        %s535 = scalar_lea.vmem %s8, %s534
        %p536 = pneg %p265
        %p537 = pneg %p262
        %p538 = scmp.lt.s32.totalorder %s33, 2
        %s539 = scalar_select %p538, %s33, 2
        %s540 = scalar_lea.vmem %s9, %s539
        %p541 = pneg %p291
        %p542 = pneg %p288
        %p543 = pneg %p312
        %p544 = pneg %p309
        %s545 = smul.u32 2, %s34
        %s546 = smul.u32 2, %s34
        %p547 = scmp.lt.s32.totalorder %s546, 3
        %s548 = scalar_select %p547, %s546, 3
        %s549 = smul.addr %s548, 8
        %s550 = scalar_lea.vmem %s2, %s549
        %s551 = smul.u32 2, %s34
        %p552 = scmp.lt.s32.totalorder %s33, 2
        %s553 = scalar_select %p552, %s33, 2
        %s554 = smul.addr %s553, 2
        %s555 = smul.addr %s554, 8
        %s556 = scalar_lea.vmem %s3, %s555
        %p557 = scmp.lt.s32.totalorder %s33, 2
        %s558 = scalar_select %p557, %s33, 2
        %s559 = scalar_lea.vmem %s5, %s558
        %p560 = scmp.lt.s32.totalorder %s33, 2
        %s561 = scalar_select %p560, %s33, 2
        %s562 = scalar_lea.vmem %s7, %s561
        %p563 = scmp.lt.s32.totalorder %s33, 2
        %s564 = scalar_select %p563, %s33, 2
        %s565 = scalar_lea.vmem %s8, %s564
        %p566 = scmp.lt.s32.totalorder %s33, 2
        %s567 = scalar_select %p566, %s33, 2
        %s568 = scalar_lea.vmem %s9, %s567
        %p570 = scmp.eq.s32.totalorder %s33, 0
        %p571 = scmp.eq.s32.totalorder %s34, 0
        %p572 = pnand %p570, %p571
        %p573 = pneg %p572
        // Predicated region
        $region77: #{tpu_custom_call.1} parent=59 // pred_check
          _
        $region78: #{tpu_custom_call.1} parent=59 // pred_check_branch
          %575 = sbr.rel (%p572) target = $region80
        $region79: #{tpu_custom_call.1} parent=59 // pred_region
          %v576 = vld [vmem:[#allocation5] sm:$0xff]
          %v577 = vld [vmem:[#allocation5 + $0x8] sm:$0xff]
          %v578 = vld [vmem:[#allocation5 + $0x10] sm:$0xff]
          %v579 = vld [vmem:[#allocation5 + $0x18] sm:$0xff]
          %580 = vst [vmem:[#allocation2] sm:$0xff] %v576
          %581 = vst [vmem:[#allocation2 + $0x8] sm:$0xff] %v577
          %582 = vst [vmem:[#allocation2 + $0x10] sm:$0xff] %v578
          %583 = vst [vmem:[#allocation2 + $0x18] sm:$0xff] %v579
        $region80: #{tpu_custom_call.1} parent=59 // pred_fallthru
          _
        // Predicated region
        $region81: #{tpu_custom_call.1} parent=59 // pred_check
          %p584 = pneg %p571
        $region82: #{tpu_custom_call.1} parent=59 // pred_check_branch
          %586 = sbr.rel (%p584) target = $region84
        $region83: #{tpu_custom_call.1} parent=59 // pred_region
          %587 = vst [vmem:[#allocation4] sm:$0x3] 0.0
        $region84: #{tpu_custom_call.1} parent=59 // pred_fallthru
          _
        %v588 = vld [vmem:[#allocation2] sm:$0xff]
        %v589 = vld [vmem:[#allocation2 + $0x8] sm:$0xff]
        %v590 = vld [vmem:[#allocation2 + $0x10] sm:$0xff]
        %v591 = vld [vmem:[#allocation2 + $0x18] sm:$0xff]
        %v592 = vpack.c.bf16 %v589, %v588
        %v593 = vpack.c.bf16 %v591, %v590
        %v594 = vld [vmem:[%s463] sm:$0xf]
        %v595 = vld [vmem:[%s463 + $0x4] sm:$0xf]
        %v596 = vld [vmem:[%s550] sm:$0xff]
        %v597 = vld [vmem:[%s550 + $0x8] sm:$0xff]
        %v598 = vld [vmem:[%s556] sm:$0xff]
        %v599 = vld [vmem:[%s556 + $0x8] sm:$0xff]
        %vm600 = vcmask 130048
        %v602 = vsel %vm600, %v596, 0
        %v605 = vsel %vm600, %v597, 0
        %607 = vmatprep.subr.mxu0 0.0
        %608 = vmatpush1.msra.mxu0 %v598
        %609 = vmatprep.subr.mxu0 0.0
        %610 = vmatpush1.msra.mxu0 %v599
        %611 = vmatprep.subr.mxu0 0.0
        %612 = vmatpush1.msra.mxu0 0.0
        %613 = vmatprep.subr.mxu0 0.0
        %614 = vmatpush1.msra.mxu0 0.0
        %615 = vmatprep.subr.mxu0 0.0
        %616 = vmatpush1.msra.mxu0 0.0
        %617 = vmatprep.subr.mxu0 0.0
        %618 = vmatpush1.msra.mxu0 0.0
        %619 = vmatprep.subr.mxu0 0.0
        %620 = vmatpush1.msra.mxu0 0.0
        %621 = vmatprep.subr.mxu0 0.0
        %622 = vmatpush1.msra.mxu0 0.0
        %623 = vmatprep.subr.mxu0 0.0
        %624 = vmatpush1.msra.mxu0 0.0
        %625 = vmatprep.subr.mxu0 0.0
        %626 = vmatpush1.msra.mxu0 0.0
        %627 = vmatprep.subr.mxu0 0.0
        %628 = vmatpush1.msra.mxu0 0.0
        %629 = vmatprep.subr.mxu0 0.0
        %630 = vmatpush1.msra.mxu0 0.0
        %631 = vmatprep.subr.mxu0 0.0
        %632 = vmatpush1.msra.mxu0 0.0
        %633 = vmatprep.subr.mxu0 0.0
        %634 = vmatpush1.msra.mxu0 0.0
        %635 = vmatprep.subr.mxu0 0.0
        %636 = vmatpush1.msra.mxu0 0.0
        %637 = vmatprep.subr.mxu0 0.0
        %638 = vmatpush1.msra.mxu0 0.0
        %639 = vmatprep.subr.mxu0 0.0
        %640 = vmatpush1.msra.mxu0 0.0
        %641 = vmatprep.subr.mxu0 0.0
        %642 = vmatpush1.msra.mxu0 0.0
        %643 = vmatprep.subr.mxu0 0.0
        %644 = vmatpush1.msra.mxu0 0.0
        %645 = vmatprep.subr.mxu0 0.0
        %646 = vmatpush1.msra.mxu0 0.0
        %647 = vmatprep.subr.mxu0 0.0
        %648 = vmatpush1.msra.mxu0 0.0
        %649 = vmatprep.subr.mxu0 0.0
        %650 = vmatpush1.msra.mxu0 0.0
        %651 = vmatprep.subr.mxu0 0.0
        %652 = vmatpush1.msra.mxu0 0.0
        %653 = vmatprep.subr.mxu0 0.0
        %654 = vmatpush1.msra.mxu0 0.0
        %655 = vmatprep.subr.mxu0 0.0
        %656 = vmatpush1.msra.mxu0 0.0
        %657 = vmatprep.subr.mxu0 0.0
        %658 = vmatpush1.msra.mxu0 0.0
        %659 = vmatprep.subr.mxu0 0.0
        %660 = vmatpush1.msra.mxu0 0.0
        %661 = vmatprep.subr.mxu0 0.0
        %662 = vmatpush1.msra.mxu0 0.0
        %663 = vmatprep.subr.mxu0 0.0
        %664 = vmatpush1.msra.mxu0 0.0
        %665 = vmatprep.subr.mxu0 0.0
        %666 = vmatpush1.msra.mxu0 0.0
        %667 = vmatprep.subr.mxu0 0.0
        %668 = vmatpush1.msra.mxu0 0.0
        %669 = vmatprep.subr.mxu0 0.0
        %670 = vmatpush1.msra.mxu0 0.0
        %671 = vmatprep.mubr.f32.mxu0 0.0
        %672 = vmatmul.mubr.f32.gmra.mrb[0].mxu0 %v602
        %v673 = vpop.f32.mrb[0].mxu0
        %v674 = vadd.f32 0.0, %v673
        %v675 = vpop.f32.mrb[0].mxu0
        %676 = vmatprep.mubr.f32.mxu0 0.0
        %677 = vmatmul.mubr.f32.gmra.mrb[0].mxu0 %v605
        %v678 = vpop.f32.mrb[0].mxu0
        %v679 = vadd.f32 0.0, %v678
        %v680 = vpop.f32.mrb[0].mxu0
        %681 = vdwg.mxu0
        %v684 = vunpack.c.l.b16 %v594
        %v685 = vunpack.c.l.b16 %v595
        %v686 = vpack.c.b16 %v685, %v684
        %vm687 = vcmask 261120
        %v689 = vsel %vm687, %v686, 0
        %691 = vmatprep.subr.bf16.mxu0 0
        %692 = vmatpush1.bf16.msra.mxu0 %v592
        %693 = vmatprep.subr.bf16.mxu0 0
        %694 = vmatpush1.bf16.msra.mxu0 %v593
        %695 = vmatprep.subr.bf16.mxu0 0
        %696 = vmatpush1.bf16.msra.mxu0 0
        %697 = vmatprep.subr.bf16.mxu0 0
        %698 = vmatpush1.bf16.msra.mxu0 0
        %699 = vmatprep.subr.bf16.mxu0 0
        %700 = vmatpush1.bf16.msra.mxu0 0
        %701 = vmatprep.subr.bf16.mxu0 0
        %702 = vmatpush1.bf16.msra.mxu0 0
        %703 = vmatprep.subr.bf16.mxu0 0
        %704 = vmatpush1.bf16.msra.mxu0 0
        %705 = vmatprep.subr.bf16.mxu0 0
        %706 = vmatpush1.bf16.msra.mxu0 0
        %707 = vmatprep.subr.bf16.mxu0 0
        %708 = vmatpush1.bf16.msra.mxu0 0
        %709 = vmatprep.subr.bf16.mxu0 0
        %710 = vmatpush1.bf16.msra.mxu0 0
        %711 = vmatprep.subr.bf16.mxu0 0
        %712 = vmatpush1.bf16.msra.mxu0 0
        %713 = vmatprep.subr.bf16.mxu0 0
        %714 = vmatpush1.bf16.msra.mxu0 0
        %715 = vmatprep.subr.bf16.mxu0 0
        %716 = vmatpush1.bf16.msra.mxu0 0
        %717 = vmatprep.subr.bf16.mxu0 0
        %718 = vmatpush1.bf16.msra.mxu0 0
        %719 = vmatprep.subr.bf16.mxu0 0
        %720 = vmatpush1.bf16.msra.mxu0 0
        %721 = vmatprep.subr.bf16.mxu0 0
        %722 = vmatpush1.bf16.msra.mxu0 0
        %723 = vmatprep.mubr.bf16.mxu0 0
        %724 = vmatmul.mubr.bf16.gmra.mrb[0].mxu0 %v689
        %v725 = vpop.f32.mrb[0].mxu0
        %v726 = vadd.f32 %v674, %v725
        %v727 = vpop.f32.mrb[0].mxu0
        %v728 = vpop.f32.mrb[0].mxu0
        %v729 = vadd.f32 %v679, %v728
        %v730 = vpop.f32.mrb[0].mxu0
        %731 = vdwg.mxu0
        %v732 = vpack.c.bf16 %v729, %v726
        %v733 = vld [vmem:[%s472] sm:$0xf]
        %v734 = vld [vmem:[%s472 + $0x4] sm:$0xf]
        %v735 = vld [vmem:[%s472 + $0x8] sm:$0xf]
        %v736 = vld [vmem:[%s472 + $0xc] sm:$0xf]
        %v737 = vld [vmem:[%s472 + $0x10] sm:$0xf]
        %v738 = vld [vmem:[%s472 + $0x14] sm:$0xf]
        %v739 = vld [vmem:[%s472 + $0x18] sm:$0xf]
        %v740 = vld [vmem:[%s472 + $0x1c] sm:$0xf]
        %v741 = vld [vmem:[%s472 + $0x20] sm:$0xf]
        %v742 = vld [vmem:[%s472 + $0x24] sm:$0xf]
        %v743 = vld [vmem:[%s472 + $0x28] sm:$0xf]
        %v744 = vld [vmem:[%s472 + $0x2c] sm:$0xf]
        %v745 = vld [vmem:[%s472 + $0x30] sm:$0xf]
        %v746 = vld [vmem:[%s472 + $0x34] sm:$0xf]
        %v747 = vld [vmem:[%s472 + $0x38] sm:$0xf]
        %v748 = vld [vmem:[%s472 + $0x3c] sm:$0xf]
        %v749 = vld [vmem:[%s559] sm:$0x1]
        %v751 = vlaneseq
        %v752 = vshrl.u32 %v751, 7
        %v753 = vsub.s32 0, %v752
        %v754 = vrot.slane %v749, %v753
        %v772 = vunpack.c.l.b16 %v733
        %v773 = vunpack.c.l.b16 %v734
        %v774 = vunpack.c.l.b16 %v735
        %v775 = vunpack.c.l.b16 %v736
        %v776 = vunpack.c.l.b16 %v737
        %v777 = vunpack.c.l.b16 %v738
        %v778 = vunpack.c.l.b16 %v739
        %v779 = vunpack.c.l.b16 %v740
        %v780 = vunpack.c.l.b16 %v741
        %v781 = vunpack.c.l.b16 %v742
        %v782 = vunpack.c.l.b16 %v743
        %v783 = vunpack.c.l.b16 %v744
        %v784 = vunpack.c.l.b16 %v745
        %v785 = vunpack.c.l.b16 %v746
        %v786 = vunpack.c.l.b16 %v747
        %v787 = vunpack.c.l.b16 %v748
        %v788 = vpack.c.b16 %v773, %v772
        %v789 = vpack.c.b16 %v775, %v774
        %v790 = vpack.c.b16 %v777, %v776
        %v791 = vpack.c.b16 %v779, %v778
        %v792 = vpack.c.b16 %v781, %v780
        %v793 = vpack.c.b16 %v783, %v782
        %v794 = vpack.c.b16 %v785, %v784
        %v795 = vpack.c.b16 %v787, %v786
        %804 = vmatprep.subr.bf16.mxu0 0
        %805 = vmatpush1.bf16.msra.mxu0 %v788
        %806 = vmatprep.subr.bf16.mxu0 0
        %807 = vmatpush1.bf16.msra.mxu0 %v789
        %808 = vmatprep.subr.bf16.mxu0 0
        %809 = vmatpush1.bf16.msra.mxu0 %v790
        %810 = vmatprep.subr.bf16.mxu0 0
        %811 = vmatpush1.bf16.msra.mxu0 %v791
        %812 = vmatprep.subr.bf16.mxu0 0
        %813 = vmatpush1.bf16.msra.mxu0 %v792
        %814 = vmatprep.subr.bf16.mxu0 0
        %815 = vmatpush1.bf16.msra.mxu0 %v793
        %816 = vmatprep.subr.bf16.mxu0 0
        %817 = vmatpush1.bf16.msra.mxu0 %v794
        %818 = vmatprep.subr.bf16.mxu0 0
        %819 = vmatpush1.bf16.msra.mxu0 %v795
        %820 = vmatprep.subr.bf16.mxu0 0
        %821 = vmatpush1.bf16.msra.mxu0 0
        %822 = vmatprep.subr.bf16.mxu0 0
        %823 = vmatpush1.bf16.msra.mxu0 0
        %824 = vmatprep.subr.bf16.mxu0 0
        %825 = vmatpush1.bf16.msra.mxu0 0
        %826 = vmatprep.subr.bf16.mxu0 0
        %827 = vmatpush1.bf16.msra.mxu0 0
        %828 = vmatprep.subr.bf16.mxu0 0
        %829 = vmatpush1.bf16.msra.mxu0 0
        %830 = vmatprep.subr.bf16.mxu0 0
        %831 = vmatpush1.bf16.msra.mxu0 0
        %832 = vmatprep.subr.bf16.mxu0 0
        %833 = vmatpush1.bf16.msra.mxu0 0
        %834 = vmatprep.subr.bf16.mxu0 0
        %835 = vmatpush1.bf16.msra.mxu0 0
        %836 = vmatprep.mubr.bf16.mxu0 0
        %837 = vmatmul.mubr.bf16.gmra.mrb[0].mxu0 %v732
        %v838 = vpop.f32.mrb[0].mxu0
        %v839 = vadd.f32 %v754, %v838
        %v840 = vpop.f32.mrb[0].mxu0
        %v841 = vpop.f32.mrb[0].mxu0
        %v842 = vadd.f32 %v754, %v841
        %v843 = vpop.f32.mrb[0].mxu0
        %844 = vdwg.mxu0
        %v845 = vmax.f32 %v839, 0.0
        %v846 = vmax.f32 %v842, 0.0
        %v847 = vpack.c.bf16 %v846, %v845
        %v848 = vld [vmem:[%s481] sm:$0xf]
        %v849 = vld [vmem:[%s481 + $0x4] sm:$0xf]
        %v850 = vld [vmem:[%s481 + $0x8] sm:$0xf]
        %v851 = vld [vmem:[%s481 + $0xc] sm:$0xf]
        %v852 = vld [vmem:[%s481 + $0x10] sm:$0xf]
        %v853 = vld [vmem:[%s481 + $0x14] sm:$0xf]
        %v854 = vld [vmem:[%s481 + $0x18] sm:$0xf]
        %v855 = vld [vmem:[%s481 + $0x1c] sm:$0xf]
        %v856 = vld [vmem:[%s481 + $0x20] sm:$0xf]
        %v857 = vld [vmem:[%s481 + $0x24] sm:$0xf]
        %v858 = vld [vmem:[%s481 + $0x28] sm:$0xf]
        %v859 = vld [vmem:[%s481 + $0x2c] sm:$0xf]
        %v860 = vld [vmem:[%s481 + $0x30] sm:$0xf]
        %v861 = vld [vmem:[%s481 + $0x34] sm:$0xf]
        %v862 = vld [vmem:[%s481 + $0x38] sm:$0xf]
        %v863 = vld [vmem:[%s481 + $0x3c] sm:$0xf]
        %v864 = vld [vmem:[%s562] sm:$0x1]
        %v866 = vlaneseq
        %v867 = vshrl.u32 %v866, 7
        %v868 = vsub.s32 0, %v867
        %v869 = vrot.slane %v864, %v868
        %v887 = vunpack.c.l.b16 %v848
        %v888 = vunpack.c.l.b16 %v849
        %v889 = vunpack.c.l.b16 %v850
        %v890 = vunpack.c.l.b16 %v851
        %v891 = vunpack.c.l.b16 %v852
        %v892 = vunpack.c.l.b16 %v853
        %v893 = vunpack.c.l.b16 %v854
        %v894 = vunpack.c.l.b16 %v855
        %v895 = vunpack.c.l.b16 %v856
        %v896 = vunpack.c.l.b16 %v857
        %v897 = vunpack.c.l.b16 %v858
        %v898 = vunpack.c.l.b16 %v859
        %v899 = vunpack.c.l.b16 %v860
        %v900 = vunpack.c.l.b16 %v861
        %v901 = vunpack.c.l.b16 %v862
        %v902 = vunpack.c.l.b16 %v863
        %v903 = vpack.c.b16 %v888, %v887
        %v904 = vpack.c.b16 %v890, %v889
        %v905 = vpack.c.b16 %v892, %v891
        %v906 = vpack.c.b16 %v894, %v893
        %v907 = vpack.c.b16 %v896, %v895
        %v908 = vpack.c.b16 %v898, %v897
        %v909 = vpack.c.b16 %v900, %v899
        %v910 = vpack.c.b16 %v902, %v901
        %919 = vmatprep.subr.bf16.mxu0 0
        %920 = vmatpush1.bf16.msra.mxu0 %v903
        %921 = vmatprep.subr.bf16.mxu0 0
        %922 = vmatpush1.bf16.msra.mxu0 %v904
        %923 = vmatprep.subr.bf16.mxu0 0
        %924 = vmatpush1.bf16.msra.mxu0 %v905
        %925 = vmatprep.subr.bf16.mxu0 0
        %926 = vmatpush1.bf16.msra.mxu0 %v906
        %927 = vmatprep.subr.bf16.mxu0 0
        %928 = vmatpush1.bf16.msra.mxu0 %v907
        %929 = vmatprep.subr.bf16.mxu0 0
        %930 = vmatpush1.bf16.msra.mxu0 %v908
        %931 = vmatprep.subr.bf16.mxu0 0
        %932 = vmatpush1.bf16.msra.mxu0 %v909
        %933 = vmatprep.subr.bf16.mxu0 0
        %934 = vmatpush1.bf16.msra.mxu0 %v910
        %935 = vmatprep.subr.bf16.mxu0 0
        %936 = vmatpush1.bf16.msra.mxu0 0
        %937 = vmatprep.subr.bf16.mxu0 0
        %938 = vmatpush1.bf16.msra.mxu0 0
        %939 = vmatprep.subr.bf16.mxu0 0
        %940 = vmatpush1.bf16.msra.mxu0 0
        %941 = vmatprep.subr.bf16.mxu0 0
        %942 = vmatpush1.bf16.msra.mxu0 0
        %943 = vmatprep.subr.bf16.mxu0 0
        %944 = vmatpush1.bf16.msra.mxu0 0
        %945 = vmatprep.subr.bf16.mxu0 0
        %946 = vmatpush1.bf16.msra.mxu0 0
        %947 = vmatprep.subr.bf16.mxu0 0
        %948 = vmatpush1.bf16.msra.mxu0 0
        %949 = vmatprep.subr.bf16.mxu0 0
        %950 = vmatpush1.bf16.msra.mxu0 0
        %951 = vmatprep.mubr.bf16.mxu0 0
        %952 = vmatmul.mubr.bf16.gmra.mrb[0].mxu0 %v847
        %v953 = vpop.f32.mrb[0].mxu0
        %v954 = vadd.f32 %v869, %v953
        %v955 = vpop.f32.mrb[0].mxu0
        %v956 = vpop.f32.mrb[0].mxu0
        %v957 = vadd.f32 %v869, %v956
        %v958 = vpop.f32.mrb[0].mxu0
        %959 = vdwg.mxu0
        %s960 = smul.u32 %s34, 16
        %s961 = scalar_lea.vmem [#allocation3], %s960
        %962 = vst [vmem:[%s961] sm:$0xff] %v954
        %963 = vst [vmem:[%s961 + $0x8] sm:$0xff] %v957
        %v964 = vlaneseq
        %v965 = vshrl.u32 %v964, 7
        %v966 = vadd.s32 %v965, 8
        %v967 = vstv %s960
        %v968 = vadd.s32 %v965, %v967
        %v969 = vadd.s32 %v966, %v967
        %vm970 = vcmp.lt.s32.totalorder %v968, 32
        %vm971 = vcmp.lt.s32.totalorder %v969, 32
        %v972 = vsel %vm970, %v954, 0.0
        %v973 = vsel %vm971, %v957, 0.0
        %v974 = vld [vmem:[#allocation4] sm:$0x1]
        %v975 = vadd.f32 %v972, %v973
        %v976 = vrot.slane %v975, 4
        %v977 = vadd.f32 %v975, %v976
        %v978 = vrot.slane %v977, 2
        %v979 = vadd.f32 %v977, %v978
        %v980 = vrot.slane %v979, 1
        %v981 = vadd.f32 %v979, %v980
        %v982 = vadd.f32 %v974, %v981
        %983 = vst [vmem:[#allocation4] sm:$0x1] %v982
        %v984 = vld [vmem:[#allocation4 + $0x1] sm:$0x1]
        %v985 = vmul.f32 %v972, %v972
        %v986 = vmul.f32 %v973, %v973
        %v987 = vadd.f32 %v985, %v986
        %v988 = vrot.slane %v987, 4
        %v989 = vadd.f32 %v987, %v988
        %v990 = vrot.slane %v989, 2
        %v991 = vadd.f32 %v989, %v990
        %v992 = vrot.slane %v991, 1
        %v993 = vadd.f32 %v991, %v992
        %v994 = vadd.f32 %v984, %v993
        %995 = vst [vmem:[#allocation4 + $0x1] sm:$0x1] %v994
        %p996 = scmp.eq.s32.totalorder %s34, 1
        // Predicated region
        $region85: #{tpu_custom_call.1} parent=59 // pred_check
          %p997 = pneg %p996
        $region86: #{tpu_custom_call.1} parent=59 // pred_check_branch
          %999 = sbr.rel (%p997) target = $region88
        $region87: #{tpu_custom_call.1} parent=59 // pred_region
          %v1000 = vld [vmem:[#allocation4] sm:$0x1]
          %v1001 = vmul.f32 %v1000, 0.03125
          %v1002 = vld [vmem:[#allocation4 + $0x1] sm:$0x1]
          %v1003 = vmul.f32 %v1002, 0.03125
          %v1004 = vmul.f32 %v1001, %v1001
          %v1005 = vsub.f32 %v1003, %v1004
          %v1006 = vld [vmem:[#allocation3] sm:$0xff]
          %v1007 = vld [vmem:[#allocation3 + $0x8] sm:$0xff]
          %v1008 = vld [vmem:[#allocation3 + $0x10] sm:$0xff]
          %v1009 = vld [vmem:[#allocation3 + $0x18] sm:$0xff]
          %v1010 = vlaneseq
          %v1011 = vshrl.u32 %v1010, 7
          %v1012 = vsub.s32 0, %v1011
          %v1013 = vrot.slane %v1001, %v1012
          %v1014 = vsub.f32 %v1006, %v1013
          %v1015 = vsub.f32 %v1007, %v1013
          %v1016 = vsub.f32 %v1008, %v1013
          %v1017 = vsub.f32 %v1009, %v1013
          %v1018 = vadd.f32 %v1005, 1e-05
          %v1019 = vrsqrt.pop %v1018
          %v1020 = vlaneseq
          %v1021 = vshrl.u32 %v1020, 7
          %v1022 = vsub.s32 0, %v1021
          %v1023 = vrot.slane %v1019, %v1022
          %v1024 = vmul.f32 %v1014, %v1023
          %v1025 = vmul.f32 %v1015, %v1023
          %v1026 = vmul.f32 %v1016, %v1023
          %v1027 = vmul.f32 %v1017, %v1023
          %v1028 = vld [vmem:[%s565] sm:$0x1]
          %v1030 = vlaneseq
          %v1031 = vshrl.u32 %v1030, 7
          %v1032 = vsub.s32 0, %v1031
          %v1033 = vrot.slane %v1028, %v1032
          %v1035 = vmul.f32 %v1024, %v1033
          %v1036 = vmul.f32 %v1025, %v1033
          %v1037 = vmul.f32 %v1026, %v1033
          %v1038 = vmul.f32 %v1027, %v1033
          %v1039 = vld [vmem:[%s568] sm:$0x1]
          %v1041 = vlaneseq
          %v1042 = vshrl.u32 %v1041, 7
          %v1043 = vsub.s32 0, %v1042
          %v1044 = vrot.slane %v1039, %v1043
          %v1046 = vadd.f32 %v1035, %v1044
          %v1047 = vadd.f32 %v1036, %v1044
          %v1048 = vadd.f32 %v1037, %v1044
          %v1049 = vadd.f32 %v1038, %v1044
          %p1050 = scmp.eq.s32.totalorder %s33, 2
          %v1051 = vmax.f32 %v1046, 0.0
          %v1052 = vmax.f32 %v1047, 0.0
          %v1053 = vmax.f32 %v1048, 0.0
          %v1054 = vmax.f32 %v1049, 0.0
          %s1055 = scalar_select %p1050, 1, 0
          %v1056 = vstv %s1055
          %vm1057 = vcmp.eq.s32.totalorder %v1056, 1
          %v1058 = vsel %vm1057, %v1046, %v1051
          %v1059 = vsel %vm1057, %v1047, %v1052
          %v1060 = vsel %vm1057, %v1048, %v1053
          %v1061 = vsel %vm1057, %v1049, %v1054
          %1062 = vst [vmem:[#allocation2] sm:$0xff] %v1058
          %1063 = vst [vmem:[#allocation2 + $0x8] sm:$0xff] %v1059
          %1064 = vst [vmem:[#allocation2 + $0x10] sm:$0xff] %v1060
          %1065 = vst [vmem:[#allocation2 + $0x18] sm:$0xff] %v1061
          %1066 = vst [vmem:[#allocation13] sm:$0xff] %v1058
          %1067 = vst [vmem:[#allocation13 + $0x8] sm:$0xff] %v1059
          %1068 = vst [vmem:[#allocation13 + $0x10] sm:$0xff] %v1060
          %1069 = vst [vmem:[#allocation13 + $0x18] sm:$0xff] %v1061
        $region88: #{tpu_custom_call.1} parent=59 // pred_fallthru
          _
        // Predicated region
        $region89: #{tpu_custom_call.1} parent=59 // pred_check
          %p1070 = pneg %p309
        $region90: #{tpu_custom_call.1} parent=59 // pred_check_branch
          %1072 = sbr.rel (%p1070) target = $region92
        $region91: #{tpu_custom_call.1} parent=59 // pred_region
          %s1074 = ssub.s32 512, 512
          %1075 = vsyncadd [#allocation7], %s1074
          %s1076 = sshll.u32 [#allocation13], 4
          %s1077 = int_to_ptr.vmem [resolvable:$true] %s1076
          %1082 = dma.vmem_to_hbm [thread:$0]  %s1077, 512, %s10, [#allocation7], 128, 128, 8
        $region92: #{tpu_custom_call.1} parent=59 // pred_fallthru
          _
        // Predicated region
        $region93: #{tpu_custom_call.1} parent=59 // pred_check
          %p1083 = pneg %p309
        $region94: #{tpu_custom_call.1} parent=59 // pred_check_branch
          %1085 = sbr.rel (%p1083) target = $region96
        $region95: #{tpu_custom_call.1} parent=59 // pred_region
          %1086 = dma.done [#allocation7], 512
        $region96: #{tpu_custom_call.1} parent=59 // pred_fallthru
          _
      $region60: #{tpu_custom_call.1} parent=5 // pred_fallthru
        _
      %p1087 = scmp.le.s32.totalorder 2, %s24
      // Predicated region
      $region97: #{tpu_custom_call.1} parent=5 // pred_check
        %p1088 = pneg %p1087
      $region98: #{tpu_custom_call.1} parent=5 // pred_check_branch
        %1090 = sbr.rel (%p1088) target = $region100
      $region99: #{tpu_custom_call.1} parent=5 // pred_region
        %s1091 = ssub.s32 %s24, 2
      $region100: #{tpu_custom_call.1} parent=5 // pred_fallthru
        _
    $region6: #{tpu_custom_call.1} parent=1 // loop_footer
      %s28 = sadd.s32 1, %s24
    $region7: #{tpu_custom_call.1} parent=1 // loop_footer_branch
      %23 = sbr.rel target = $region3
    $region8: #{tpu_custom_call.1} parent=1 // loop_exit
      _
    %1092 = vsyncpa [#allocation6], 1
    %s1093 = scalar_lea.sflag [#allocation6], 1
    %1094 = vsyncpa %s1093, 1
    %1095 = vsyncpa [#allocation9], 1
    %s1096 = scalar_lea.sflag [#allocation9], 1
    %1097 = vsyncpa %s1096, 1
    %1098 = vsyncpa [#allocation12], 1
    %s1099 = scalar_lea.sflag [#allocation12], 1
    %1100 = vsyncpa %s1099, 1
    %1101 = vsyncpa [#allocation7], 1
    %s1102 = scalar_lea.sflag [#allocation7], 1
    %1103 = vsyncpa %s1102, 1

</llo_original>
